<compile_context>
chip_gen: v7x
topology: tpu7x:2x2x1
jax: 0.10.0
libtpu: 0.0.40
codegen_flags: <defaults>
</compile_context>

<pallas_src>
from functools import partial

import jax
import jax.numpy as jnp
from jax import lax
from jax.experimental import pallas as pl
from jax.experimental.pallas import tpu as pltpu

K_MASK = -2.3819763e+38


# ---------------------------------------------------------------------------
# Kernel 1: fused QKV projection + RoPE, once per (batch, seq tile).
# ---------------------------------------------------------------------------
def qkv_rope_kernel(x_ref, wqkv_ref, sin_ref, cos_ref,
                    q_ref, k_ref, v_ref, *, num_heads, head_dim):
    half = head_dim // 2
    scale = head_dim ** -0.5
    nh = num_heads * head_dim

    sin_signed = sin_ref[0]            # [ts, H] = [-sin, sin]
    cos_full = cos_ref[0]              # [ts, H] = [cos, cos]

    def rope(u):
        # Half-swap on the XLU when the head is lane-aligned (prod H=256);
        # slice+concat fallback for small/unaligned head dims (toy H=16).
        if head_dim % 256 == 0:
            swapped = pltpu.roll(u, shift=half, axis=-1)
        else:
            swapped = jnp.concatenate([u[:, half:], u[:, :half]], axis=-1)
        return u * cos_full + swapped * sin_signed

    # One fused [ts, D] x [D, 3*N*H] MXU matmul for Q, K and V of ALL heads.
    y = jnp.dot(x_ref[0], wqkv_ref[...], preferred_element_type=jnp.float32)

    # TODO(synk): for production head counts (N=16..32) switch to
    # lax.fori_loop + pl.ds(pl.multiple_of(h*head_dim, head_dim), head_dim)
    # to bound live ranges; static unroll is fine at the small test config.
    for h in range(num_heads):
        q_sl = slice(h * head_dim, (h + 1) * head_dim)
        k_sl = slice(nh + h * head_dim, nh + (h + 1) * head_dim)
        v_sl = slice(2 * nh + h * head_dim, 2 * nh + (h + 1) * head_dim)
        q_ref[0, h] = (rope(y[:, q_sl]) * scale).astype(q_ref.dtype)   # pre-scaled Q
        k_ref[0, h] = rope(y[:, k_sl]).astype(k_ref.dtype)
        v_ref[0, h] = y[:, v_sl].astype(v_ref.dtype)


# ---------------------------------------------------------------------------
# Kernel 2: flash attention over precomputed Q/K/V + fused output projection.
# ---------------------------------------------------------------------------
def flash_attn_kernel(blk_ref, q_ref, k_ref, v_ref, mask_ref, wo_ref,
                      out_ref, acc_scr, m_scr, l_scr,
                      *, num_heads, head_dim, exp_dtype):
    b = pl.program_id(0)
    qi = pl.program_id(1)
    ki = pl.program_id(2)
    nq = pl.num_programs(1)
    nk = pl.num_programs(2)

    @pl.when(ki == 0)
    def _init():
        m_scr[...] = jnp.full(m_scr.shape, -jnp.inf, dtype=m_scr.dtype)
        l_scr[...] = jnp.zeros(l_scr.shape, dtype=l_scr.dtype)
        acc_scr[...] = jnp.zeros(acc_scr.shape, dtype=acc_scr.dtype)

    # Scalar-prefetched per-(b, qi, ki) tile liveness: skip fully-masked tiles.
    live = blk_ref[(b * nq + qi) * nk + ki]

    @pl.when(live != 0)
    def _tile():
        mask = mask_ref[0].astype(jnp.int32) != 0                     # [tq, tk]
        # TODO(synk): use lax.fori_loop over heads for production head counts.
        for h in range(num_heads):
            qh = q_ref[0, h]                                          # [tq, H] bf16
            kh = k_ref[0, h]                                          # [tk, H] bf16
            vh = v_ref[0, h]                                          # [tk, H] bf16
            # Contract the last dim of both operands -> no K transpose/relayout.
            s = lax.dot_general(qh, kh, (((1,), (1,)), ((), ())),
                                preferred_element_type=jnp.float32)   # [tq, tk]
            s = jnp.where(mask, s, K_MASK)

            m_prev = m_scr[h]                                         # [tq, 1]
            m_new = jnp.maximum(m_prev, jnp.max(s, axis=-1, keepdims=True))
            alpha = jnp.exp(m_prev - m_new)                           # f32
            # bf16 exp halves EUP pressure on v6e/v7x; f32 via fallback path.
            p = jnp.exp((s - m_new).astype(exp_dtype))
            l_scr[h] = alpha * l_scr[h] + jnp.sum(
                p.astype(jnp.float32), axis=-1, keepdims=True)
            acc_scr[h] = alpha * acc_scr[h] + jnp.dot(
                p.astype(jnp.bfloat16), vh, preferred_element_type=jnp.float32)
            m_scr[h] = m_new

    @pl.when(ki == nk - 1)
    def _finalize():
        tq = out_ref.shape[1]
        d = out_ref.shape[2]
        o = jnp.zeros((tq, d), dtype=jnp.float32)
        for h in range(num_heads):
            lh = l_scr[h]
            # 1/l folded straight into the bf16 cast (no write-back to acc).
            # l==0 only for rows masked across ALL kv tiles (all tiles skipped).
            # TODO(synk): reference gives a uniform softmax (mean of V) for such
            # degenerate rows; here they produce 0 instead of NaN.
            inv_l = jnp.where(lh > 0.0, pl.reciprocal(lh, approx=True), 0.0)
            enc_h = (acc_scr[h] * inv_l).astype(jnp.bfloat16)          # [tq, H]
            wo_h = wo_ref[pl.ds(h * head_dim, head_dim), :]            # [H, D]
            o = o + jnp.dot(enc_h, wo_h, preferred_element_type=jnp.float32)
        out_ref[0] = o.astype(out_ref.dtype)
        # TODO(synk): optionally emit bf16 output if downstream accepts it.


# ---------------------------------------------------------------------------
# Wrapper
# ---------------------------------------------------------------------------
def _pick_tile(dim, candidates):
    for t in candidates:
        if dim % t == 0:
            return t
    # TODO(synk): masked remainder tiles for dims with no clean divisor.
    return dim


def _attention_forward_impl(x, segment_pos, attn_mask, qkv_w, attn_vec_w,
                            *, single_buffer_weights, exp_dtype):
    B, T, D = x.shape
    _, N, _, H = qkv_w.shape
    S = attn_mask.shape[-1]
    NH = N * H
    assert S == T, "cache/decode path (S != T) not implemented"

    # Largest tile dividing the sequence (never a silent whole-sequence block
    # unless the dim itself is small/irregular).
    tq = _pick_tile(T, (256, 128, 64, 32, 16, 8))
    tk = _pick_tile(S, (512, 256, 128))   # mask lane dim: multiple of 128 or full
    nq, nk = T // tq, S // tk

    # ---- host-side prep ----------------------------------------------------
    x_bf16 = x.astype(jnp.bfloat16)
    # Fused projection weights: [D, 3*N*H] bf16 (Q | K | V), plus [N*H, D] wo.
    wq = jnp.transpose(qkv_w[0], (1, 0, 2)).reshape(D, NH)
    wk = jnp.transpose(qkv_w[1], (1, 0, 2)).reshape(D, NH)
    wv = jnp.transpose(qkv_w[2], (1, 0, 2)).reshape(D, NH)
    wqkv = jnp.concatenate([wq, wk, wv], axis=1).astype(jnp.bfloat16)
    wo = attn_vec_w.reshape(NH, D).astype(jnp.bfloat16)

    # RoPE tables at full head width with the sign folded in (shared by heads).
    half = H // 2
    fraction = 2.0 * jnp.arange(half, dtype=jnp.float32) / H
    timescale = 10000.0 ** fraction
    sinusoid = segment_pos.astype(jnp.float32)[..., None] / timescale[None, None, :]
    sin = jnp.sin(sinusoid)
    cos = jnp.cos(sinusoid)
    cos_full = jnp.concatenate([cos, cos], axis=-1)          # [B, T, H]
    sin_signed = jnp.concatenate([-sin, sin], axis=-1)       # [B, T, H]

    mask_bool = attn_mask != 0
    mask_i8 = mask_bool.astype(jnp.int8)                     # 4x less HBM than i32
    # Per-(b, qi, ki) tile liveness for causal/blocky mask tile skipping.
    block_live = mask_bool.reshape(B, nq, tq, nk, tk).any(axis=(2, 4))
    block_live = block_live.reshape(-1).astype(jnp.int32)

    def weight_spec(shape, index_map):
        # Grid-invariant weights: single-buffer (double-buffering is useless
        # and would not fit v7x's 64 MiB VMEM at real Gemma dims).
        if single_buffer_weights:
            return pl.BlockSpec(shape, index_map, pipeline_mode=pl.Buffered(1))
        return pl.BlockSpec(shape, index_map)

    # ---- kernel 1: QKV projection + RoPE (once per token) -------------------
    q, k, v = pl.pallas_call(
        partial(qkv_rope_kernel, num_heads=N, head_dim=H),
        out_shape=(jax.ShapeDtypeStruct((B, N, T, H), jnp.bfloat16),) * 3,
        grid_spec=pltpu.PrefetchScalarGridSpec(
            num_scalar_prefetch=0,
            grid=(B, nq),
            in_specs=[
                pl.BlockSpec((1, tq, D), lambda b, ti: (b, ti, 0)),     # x tile
                weight_spec((D, 3 * NH), lambda b, ti: (0, 0)),         # fused wqkv
                pl.BlockSpec((1, tq, H), lambda b, ti: (b, ti, 0)),     # signed sin
                pl.BlockSpec((1, tq, H), lambda b, ti: (b, ti, 0)),     # cos
            ],
            out_specs=[
                pl.BlockSpec((1, N, tq, H), lambda b, ti: (b, 0, ti, 0)),
                pl.BlockSpec((1, N, tq, H), lambda b, ti: (b, 0, ti, 0)),
                pl.BlockSpec((1, N, tq, H), lambda b, ti: (b, 0, ti, 0)),
            ],
        ),
        compiler_params=pltpu.CompilerParams(
            dimension_semantics=("parallel", "parallel"),
            # Single-buffered fused weight dominates; leave headroom on v7x.
            vmem_limit_bytes=48 * 1024 * 1024,
        ),
    )(x_bf16, wqkv, sin_signed, cos_full)

    # ---- kernel 2: flash attention + fused output projection ----------------
    out = pl.pallas_call(
        partial(flash_attn_kernel, num_heads=N, head_dim=H, exp_dtype=exp_dtype),
        out_shape=jax.ShapeDtypeStruct((B, T, D), jnp.float32),
        grid_spec=pltpu.PrefetchScalarGridSpec(
            num_scalar_prefetch=1,                                    # block_live
            grid=(B, nq, nk),
            in_specs=[
                pl.BlockSpec((1, N, tq, H), lambda b, qi, ki, bm: (b, 0, qi, 0)),
                pl.BlockSpec((1, N, tk, H), lambda b, qi, ki, bm: (b, 0, ki, 0)),
                pl.BlockSpec((1, N, tk, H), lambda b, qi, ki, bm: (b, 0, ki, 0)),
                pl.BlockSpec((1, tq, tk), lambda b, qi, ki, bm: (b, qi, ki)),
                weight_spec((NH, D), lambda b, qi, ki, bm: (0, 0)),   # wo
            ],
            out_specs=pl.BlockSpec((1, tq, D), lambda b, qi, ki, bm: (b, qi, 0)),
            scratch_shapes=[
                pltpu.VMEM((N, tq, H), jnp.float32),   # per-head output accumulator
                pltpu.VMEM((N, tq, 1), jnp.float32),   # online-softmax running max
                pltpu.VMEM((N, tq, 1), jnp.float32),   # online-softmax running sum
            ],
        ),
        compiler_params=pltpu.CompilerParams(
            dimension_semantics=("parallel", "parallel", "arbitrary"),
            # No projection weights resident here any more -> modest budget
            # that fits v7x's 64 MiB VMEM with room for compiler scratch.
            vmem_limit_bytes=32 * 1024 * 1024,
        ),
    )(block_live, q, k, v, mask_i8, wo)
    return out


def attention_forward(x, segment_pos, attn_mask, qkv_w, attn_vec_w):
    """x: [B,T,D] f32, segment_pos: [B,T] i32, attn_mask: [B,T,S] bool,
    qkv_w: [3,N,D,H] f32, attn_vec_w: [N,H,D] f32  ->  [B,T,D] f32."""
    try:
        return _attention_forward_impl(
            x, segment_pos, attn_mask, qkv_w, attn_vec_w,
            single_buffer_weights=True, exp_dtype=jnp.bfloat16)
    except Exception:
        # Conservative fallback (e.g. older jax without pl.Buffered support,
        # or a chip without bf16 EUP): double-buffered weights, f32 exp.
        return _attention_forward_impl(
            x, segment_pos, attn_mask, qkv_w, attn_vec_w,
            single_buffer_weights=False, exp_dtype=jnp.float32)


# ---------------------------------------------------------------------------
# Pure-JAX f32 reference mirroring the PyTorch module's forward.
# ---------------------------------------------------------------------------
def attention_reference(x, segment_pos, attn_mask, qkv_w, attn_vec_w):
    H = qkv_w.shape[-1]
    q, k, v = jnp.einsum('BTD,SNDH->SBTNH', x, qkv_w)

    def rope(u):
        frac = 2.0 * jnp.arange(0, H // 2, dtype=jnp.float32) / H
        ts = 10000.0 ** frac
        sinus = segment_pos.astype(jnp.float32)[..., None] / ts
        sin = jnp.sin(sinus)[:, :, None, :]
        cos = jnp.cos(sinus)[:, :, None, :]
        u1, u2 = jnp.split(u, 2, axis=-1)
        return jnp.concatenate([u1 * cos - u2 * sin, u2 * cos + u1 * sin], axis=-1)

    q = rope(q) * (H ** -0.5)
    k = rope(k)
    logits = jnp.einsum('BTNH,BSNH->BTNS', q, k)
    padded = jnp.where(attn_mask[:, :, None, :], logits, K_MASK)
    probs = jax.nn.softmax(padded, axis=-1)
    enc = jnp.einsum('BTNS,BSNH->BTNH', probs, v)
    return jnp.einsum('BTNH,NHD->BTD', enc, attn_vec_w)


if __name__ == "__main__":
    # Small shapes consistent with the module: B=2, T=8, D=32, N=4 heads, H=16.
    B, T, D, N, H = 2, 8, 32, 4, 16

    key = jax.random.PRNGKey(0)
    k_x, k_qkv, k_o = jax.random.split(key, 3)

    x = jax.random.normal(k_x, (B, T, D), dtype=jnp.float32)
    segment_pos = jnp.broadcast_to(jnp.arange(T, dtype=jnp.int32), (B, T))
    # Causal attention mask [B, T, S] (S == T, no cache).
    attn_mask = jnp.broadcast_to(
        jnp.tril(jnp.ones((T, T), dtype=jnp.bool_)), (B, T, T))

    qkv_w = 0.1 * jax.random.normal(k_qkv, (3, N, D, H), dtype=jnp.float32)
    attn_vec_w = 0.1 * jax.random.normal(k_o, (N, H, D), dtype=jnp.float32)

    out = attention_forward(x, segment_pos, attn_mask, qkv_w, attn_vec_w)
    out = jax.block_until_ready(out)

    ref = attention_reference(x, segment_pos, attn_mask, qkv_w, attn_vec_w)
    assert out.shape == (B, T, D)
    # bf16 MXU inputs + bf16 exp + approx reciprocal -> bf16-level tolerance.
    assert jnp.allclose(out, ref, rtol=2e-2, atol=2e-2), "mismatch vs reference"

    print("KERNEL_OK")
</pallas_src>

<mosaic_0001>
module attributes {stable_mosaic.version = 11 : i64} {
  func.func @qkv_rope_kernel(%arg0: i32, %arg1: i32, %arg2: memref<1x8x32xbf16, #tpu.memory_space<vmem>>, %arg3: memref<32x192xbf16, #tpu.memory_space<vmem>>, %arg4: memref<1x8x16xf32, #tpu.memory_space<vmem>>, %arg5: memref<1x8x16xf32, #tpu.memory_space<vmem>>, %arg6: memref<1x4x8x16xbf16, #tpu.memory_space<vmem>>, %arg7: memref<1x4x8x16xbf16, #tpu.memory_space<vmem>>, %arg8: memref<1x4x8x16xbf16, #tpu.memory_space<vmem>>) attributes {dimension_semantics = [#tpu.dimension_semantics<parallel>, #tpu.dimension_semantics<parallel>], iteration_bounds = array<i64: 2, 1>, scalar_prefetch = 0 : i64, scratch_operands = 0 : i64, tpu.core_type = #tpu.core_type<tc>, window_params = [{transform_indices = @transform_0, window_bounds = array<i64: 1, 8, 32>}, {pipeline_mode = #tpu.pipeline_mode<synchronous>, transform_indices = @transform_1, window_bounds = array<i64: 32, 192>}, {transform_indices = @transform_2, window_bounds = array<i64: 1, 8, 16>}, {transform_indices = @transform_3, window_bounds = array<i64: 1, 8, 16>}, {transform_indices = @transform_4, window_bounds = array<i64: 1, 4, 8, 16>}, {transform_indices = @transform_5, window_bounds = array<i64: 1, 4, 8, 16>}, {transform_indices = @transform_6, window_bounds = array<i64: 1, 4, 8, 16>}]} {
    %c0 = arith.constant 0 : index
    %c0_0 = arith.constant 0 : index
    %c0_1 = arith.constant 0 : index
    %0 = vector.load %arg4[%c0, %c0_0, %c0_1] : memref<1x8x16xf32, #tpu.memory_space<vmem>>, vector<1x8x16xf32>
    %1 = vector.shape_cast %0 : vector<1x8x16xf32> to vector<8x16xf32>
    %c0_2 = arith.constant 0 : index
    %c0_3 = arith.constant 0 : index
    %c0_4 = arith.constant 0 : index
    %2 = vector.load %arg5[%c0_2, %c0_3, %c0_4] : memref<1x8x16xf32, #tpu.memory_space<vmem>>, vector<1x8x16xf32>
    %3 = vector.shape_cast %2 : vector<1x8x16xf32> to vector<8x16xf32>
    %c0_5 = arith.constant 0 : index
    %c0_6 = arith.constant 0 : index
    %c0_7 = arith.constant 0 : index
    %4 = vector.load %arg2[%c0_5, %c0_6, %c0_7] : memref<1x8x32xbf16, #tpu.memory_space<vmem>>, vector<1x8x32xbf16>
    %5 = vector.shape_cast %4 : vector<1x8x32xbf16> to vector<8x32xbf16>
    %c0_8 = arith.constant 0 : index
    %c0_9 = arith.constant 0 : index
    %6 = vector.load %arg3[%c0_8, %c0_9] : memref<32x192xbf16, #tpu.memory_space<vmem>>, vector<32x192xbf16>
    %cst = arith.constant dense<0.000000e+00> : vector<8x192xf32>
    %7 = tpu.matmul %5, %6, %cst {dimension_numbers = #tpu.dot_dimension_numbers<[1], [0], [0], [1], [0, 0, 1, 1], [], []>} : vector<8x32xbf16>, vector<32x192xbf16>, vector<8x192xf32> -> vector<8x192xf32>
    %8 = vector.extract_strided_slice %7 {offsets = [0, 0], sizes = [8, 16], strides = [1, 1]} : vector<8x192xf32> to vector<8x16xf32>
    %9 = vector.extract_strided_slice %8 {offsets = [0, 8], sizes = [8, 8], strides = [1, 1]} : vector<8x16xf32> to vector<8x8xf32>
    %10 = vector.extract_strided_slice %8 {offsets = [0, 0], sizes = [8, 8], strides = [1, 1]} : vector<8x16xf32> to vector<8x8xf32>
    %11 = tpu.concatenate %9, %10 in 1 : vector<8x8xf32>, vector<8x8xf32> -> vector<8x16xf32>
    %12 = arith.mulf %8, %3 : vector<8x16xf32>
    %13 = arith.mulf %11, %1 : vector<8x16xf32>
    %14 = arith.addf %12, %13 : vector<8x16xf32>
    %cst_10 = arith.constant 2.500000e-01 : f32
    %15 = vector.broadcast %cst_10 : f32 to vector<8x16xf32>
    %16 = arith.mulf %14, %15 : vector<8x16xf32>
    %17 = arith.truncf %16 : vector<8x16xf32> to vector<8x16xbf16>
    %c0_11 = arith.constant 0 : index
    %c0_12 = arith.constant 0 : index
    %c0_13 = arith.constant 0 : index
    %c0_14 = arith.constant 0 : index
    %18 = vector.load %arg6[%c0_11, %c0_12, %c0_13, %c0_14] : memref<1x4x8x16xbf16, #tpu.memory_space<vmem>>, vector<1x1x8x16xbf16>
    %19 = vector.shape_cast %18 : vector<1x1x8x16xbf16> to vector<8x16xbf16>
    %20 = vector.shape_cast %17 : vector<8x16xbf16> to vector<1x1x8x16xbf16>
    tpu.vector_store %arg6[%c0_11, %c0_12, %c0_13, %c0_14], %20 {strides = array<i32>} : memref<1x4x8x16xbf16, #tpu.memory_space<vmem>>, vector<1x1x8x16xbf16>,
    %21 = vector.extract_strided_slice %7 {offsets = [0, 64], sizes = [8, 16], strides = [1, 1]} : vector<8x192xf32> to vector<8x16xf32>
    %22 = vector.extract_strided_slice %21 {offsets = [0, 8], sizes = [8, 8], strides = [1, 1]} : vector<8x16xf32> to vector<8x8xf32>
    %23 = vector.extract_strided_slice %21 {offsets = [0, 0], sizes = [8, 8], strides = [1, 1]} : vector<8x16xf32> to vector<8x8xf32>
    %24 = tpu.concatenate %22, %23 in 1 : vector<8x8xf32>, vector<8x8xf32> -> vector<8x16xf32>
    %25 = arith.mulf %21, %3 : vector<8x16xf32>
    %26 = arith.mulf %24, %1 : vector<8x16xf32>
    %27 = arith.addf %25, %26 : vector<8x16xf32>
    %28 = arith.truncf %27 : vector<8x16xf32> to vector<8x16xbf16>
    %c0_15 = arith.constant 0 : index
    %c0_16 = arith.constant 0 : index
    %c0_17 = arith.constant 0 : index
    %c0_18 = arith.constant 0 : index
    %29 = vector.load %arg7[%c0_15, %c0_16, %c0_17, %c0_18] : memref<1x4x8x16xbf16, #tpu.memory_space<vmem>>, vector<1x1x8x16xbf16>
    %30 = vector.shape_cast %29 : vector<1x1x8x16xbf16> to vector<8x16xbf16>
    %31 = vector.shape_cast %28 : vector<8x16xbf16> to vector<1x1x8x16xbf16>
    tpu.vector_store %arg7[%c0_15, %c0_16, %c0_17, %c0_18], %31 {strides = array<i32>} : memref<1x4x8x16xbf16, #tpu.memory_space<vmem>>, vector<1x1x8x16xbf16>,
    %32 = vector.extract_strided_slice %7 {offsets = [0, 128], sizes = [8, 16], strides = [1, 1]} : vector<8x192xf32> to vector<8x16xf32>
    %33 = arith.truncf %32 : vector<8x16xf32> to vector<8x16xbf16>
    %c0_19 = arith.constant 0 : index
    %c0_20 = arith.constant 0 : index
    %c0_21 = arith.constant 0 : index
    %c0_22 = arith.constant 0 : index
    %34 = vector.load %arg8[%c0_19, %c0_20, %c0_21, %c0_22] : memref<1x4x8x16xbf16, #tpu.memory_space<vmem>>, vector<1x1x8x16xbf16>
    %35 = vector.shape_cast %34 : vector<1x1x8x16xbf16> to vector<8x16xbf16>
    %36 = vector.shape_cast %33 : vector<8x16xbf16> to vector<1x1x8x16xbf16>
    tpu.vector_store %arg8[%c0_19, %c0_20, %c0_21, %c0_22], %36 {strides = array<i32>} : memref<1x4x8x16xbf16, #tpu.memory_space<vmem>>, vector<1x1x8x16xbf16>,
    %37 = vector.extract_strided_slice %7 {offsets = [0, 16], sizes = [8, 16], strides = [1, 1]} : vector<8x192xf32> to vector<8x16xf32>
    %38 = vector.extract_strided_slice %37 {offsets = [0, 8], sizes = [8, 8], strides = [1, 1]} : vector<8x16xf32> to vector<8x8xf32>
    %39 = vector.extract_strided_slice %37 {offsets = [0, 0], sizes = [8, 8], strides = [1, 1]} : vector<8x16xf32> to vector<8x8xf32>
    %40 = tpu.concatenate %38, %39 in 1 : vector<8x8xf32>, vector<8x8xf32> -> vector<8x16xf32>
    %41 = arith.mulf %37, %3 : vector<8x16xf32>
    %42 = arith.mulf %40, %1 : vector<8x16xf32>
    %43 = arith.addf %41, %42 : vector<8x16xf32>
    %cst_23 = arith.constant 2.500000e-01 : f32
    %44 = vector.broadcast %cst_23 : f32 to vector<8x16xf32>
    %45 = arith.mulf %43, %44 : vector<8x16xf32>
    %46 = arith.truncf %45 : vector<8x16xf32> to vector<8x16xbf16>
    %c0_24 = arith.constant 0 : index
    %c1 = arith.constant 1 : index
    %c0_25 = arith.constant 0 : index
    %c0_26 = arith.constant 0 : index
    %47 = vector.load %arg6[%c0_24, %c1, %c0_25, %c0_26] : memref<1x4x8x16xbf16, #tpu.memory_space<vmem>>, vector<1x1x8x16xbf16>
    %48 = vector.shape_cast %47 : vector<1x1x8x16xbf16> to vector<8x16xbf16>
    %49 = vector.shape_cast %46 : vector<8x16xbf16> to vector<1x1x8x16xbf16>
    tpu.vector_store %arg6[%c0_24, %c1, %c0_25, %c0_26], %49 {strides = array<i32>} : memref<1x4x8x16xbf16, #tpu.memory_space<vmem>>, vector<1x1x8x16xbf16>,
    %50 = vector.extract_strided_slice %7 {offsets = [0, 80], sizes = [8, 16], strides = [1, 1]} : vector<8x192xf32> to vector<8x16xf32>
    %51 = vector.extract_strided_slice %50 {offsets = [0, 8], sizes = [8, 8], strides = [1, 1]} : vector<8x16xf32> to vector<8x8xf32>
    %52 = vector.extract_strided_slice %50 {offsets = [0, 0], sizes = [8, 8], strides = [1, 1]} : vector<8x16xf32> to vector<8x8xf32>
    %53 = tpu.concatenate %51, %52 in 1 : vector<8x8xf32>, vector<8x8xf32> -> vector<8x16xf32>
    %54 = arith.mulf %50, %3 : vector<8x16xf32>
    %55 = arith.mulf %53, %1 : vector<8x16xf32>
    %56 = arith.addf %54, %55 : vector<8x16xf32>
    %57 = arith.truncf %56 : vector<8x16xf32> to vector<8x16xbf16>
    %c0_27 = arith.constant 0 : index
    %c1_28 = arith.constant 1 : index
    %c0_29 = arith.constant 0 : index
    %c0_30 = arith.constant 0 : index
    %58 = vector.load %arg7[%c0_27, %c1_28, %c0_29, %c0_30] : memref<1x4x8x16xbf16, #tpu.memory_space<vmem>>, vector<1x1x8x16xbf16>
    %59 = vector.shape_cast %58 : vector<1x1x8x16xbf16> to vector<8x16xbf16>
    %60 = vector.shape_cast %57 : vector<8x16xbf16> to vector<1x1x8x16xbf16>
    tpu.vector_store %arg7[%c0_27, %c1_28, %c0_29, %c0_30], %60 {strides = array<i32>} : memref<1x4x8x16xbf16, #tpu.memory_space<vmem>>, vector<1x1x8x16xbf16>,
    %61 = vector.extract_strided_slice %7 {offsets = [0, 144], sizes = [8, 16], strides = [1, 1]} : vector<8x192xf32> to vector<8x16xf32>
    %62 = arith.truncf %61 : vector<8x16xf32> to vector<8x16xbf16>
    %c0_31 = arith.constant 0 : index
    %c1_32 = arith.constant 1 : index
    %c0_33 = arith.constant 0 : index
    %c0_34 = arith.constant 0 : index
    %63 = vector.load %arg8[%c0_31, %c1_32, %c0_33, %c0_34] : memref<1x4x8x16xbf16, #tpu.memory_space<vmem>>, vector<1x1x8x16xbf16>
    %64 = vector.shape_cast %63 : vector<1x1x8x16xbf16> to vector<8x16xbf16>
    %65 = vector.shape_cast %62 : vector<8x16xbf16> to vector<1x1x8x16xbf16>
    tpu.vector_store %arg8[%c0_31, %c1_32, %c0_33, %c0_34], %65 {strides = array<i32>} : memref<1x4x8x16xbf16, #tpu.memory_space<vmem>>, vector<1x1x8x16xbf16>,
    %66 = vector.extract_strided_slice %7 {offsets = [0, 32], sizes = [8, 16], strides = [1, 1]} : vector<8x192xf32> to vector<8x16xf32>
    %67 = vector.extract_strided_slice %66 {offsets = [0, 8], sizes = [8, 8], strides = [1, 1]} : vector<8x16xf32> to vector<8x8xf32>
    %68 = vector.extract_strided_slice %66 {offsets = [0, 0], sizes = [8, 8], strides = [1, 1]} : vector<8x16xf32> to vector<8x8xf32>
    %69 = tpu.concatenate %67, %68 in 1 : vector<8x8xf32>, vector<8x8xf32> -> vector<8x16xf32>
    %70 = arith.mulf %66, %3 : vector<8x16xf32>
    %71 = arith.mulf %69, %1 : vector<8x16xf32>
    %72 = arith.addf %70, %71 : vector<8x16xf32>
    %cst_35 = arith.constant 2.500000e-01 : f32
    %73 = vector.broadcast %cst_35 : f32 to vector<8x16xf32>
    %74 = arith.mulf %72, %73 : vector<8x16xf32>
    %75 = arith.truncf %74 : vector<8x16xf32> to vector<8x16xbf16>
    %c0_36 = arith.constant 0 : index
    %c2 = arith.constant 2 : index
    %c0_37 = arith.constant 0 : index
    %c0_38 = arith.constant 0 : index
    %76 = vector.load %arg6[%c0_36, %c2, %c0_37, %c0_38] : memref<1x4x8x16xbf16, #tpu.memory_space<vmem>>, vector<1x1x8x16xbf16>
    %77 = vector.shape_cast %76 : vector<1x1x8x16xbf16> to vector<8x16xbf16>
    %78 = vector.shape_cast %75 : vector<8x16xbf16> to vector<1x1x8x16xbf16>
    tpu.vector_store %arg6[%c0_36, %c2, %c0_37, %c0_38], %78 {strides = array<i32>} : memref<1x4x8x16xbf16, #tpu.memory_space<vmem>>, vector<1x1x8x16xbf16>,
    %79 = vector.extract_strided_slice %7 {offsets = [0, 96], sizes = [8, 16], strides = [1, 1]} : vector<8x192xf32> to vector<8x16xf32>
    %80 = vector.extract_strided_slice %79 {offsets = [0, 8], sizes = [8, 8], strides = [1, 1]} : vector<8x16xf32> to vector<8x8xf32>
    %81 = vector.extract_strided_slice %79 {offsets = [0, 0], sizes = [8, 8], strides = [1, 1]} : vector<8x16xf32> to vector<8x8xf32>
    %82 = tpu.concatenate %80, %81 in 1 : vector<8x8xf32>, vector<8x8xf32> -> vector<8x16xf32>
    %83 = arith.mulf %79, %3 : vector<8x16xf32>
    %84 = arith.mulf %82, %1 : vector<8x16xf32>
    %85 = arith.addf %83, %84 : vector<8x16xf32>
    %86 = arith.truncf %85 : vector<8x16xf32> to vector<8x16xbf16>
    %c0_39 = arith.constant 0 : index
    %c2_40 = arith.constant 2 : index
    %c0_41 = arith.constant 0 : index
    %c0_42 = arith.constant 0 : index
    %87 = vector.load %arg7[%c0_39, %c2_40, %c0_41, %c0_42] : memref<1x4x8x16xbf16, #tpu.memory_space<vmem>>, vector<1x1x8x16xbf16>
    %88 = vector.shape_cast %87 : vector<1x1x8x16xbf16> to vector<8x16xbf16>
    %89 = vector.shape_cast %86 : vector<8x16xbf16> to vector<1x1x8x16xbf16>
    tpu.vector_store %arg7[%c0_39, %c2_40, %c0_41, %c0_42], %89 {strides = array<i32>} : memref<1x4x8x16xbf16, #tpu.memory_space<vmem>>, vector<1x1x8x16xbf16>,
    %90 = vector.extract_strided_slice %7 {offsets = [0, 160], sizes = [8, 16], strides = [1, 1]} : vector<8x192xf32> to vector<8x16xf32>
    %91 = arith.truncf %90 : vector<8x16xf32> to vector<8x16xbf16>
    %c0_43 = arith.constant 0 : index
    %c2_44 = arith.constant 2 : index
    %c0_45 = arith.constant 0 : index
    %c0_46 = arith.constant 0 : index
    %92 = vector.load %arg8[%c0_43, %c2_44, %c0_45, %c0_46] : memref<1x4x8x16xbf16, #tpu.memory_space<vmem>>, vector<1x1x8x16xbf16>
    %93 = vector.shape_cast %92 : vector<1x1x8x16xbf16> to vector<8x16xbf16>
    %94 = vector.shape_cast %91 : vector<8x16xbf16> to vector<1x1x8x16xbf16>
    tpu.vector_store %arg8[%c0_43, %c2_44, %c0_45, %c0_46], %94 {strides = array<i32>} : memref<1x4x8x16xbf16, #tpu.memory_space<vmem>>, vector<1x1x8x16xbf16>,
    %95 = vector.extract_strided_slice %7 {offsets = [0, 48], sizes = [8, 16], strides = [1, 1]} : vector<8x192xf32> to vector<8x16xf32>
    %96 = vector.extract_strided_slice %95 {offsets = [0, 8], sizes = [8, 8], strides = [1, 1]} : vector<8x16xf32> to vector<8x8xf32>
    %97 = vector.extract_strided_slice %95 {offsets = [0, 0], sizes = [8, 8], strides = [1, 1]} : vector<8x16xf32> to vector<8x8xf32>
    %98 = tpu.concatenate %96, %97 in 1 : vector<8x8xf32>, vector<8x8xf32> -> vector<8x16xf32>
    %99 = arith.mulf %95, %3 : vector<8x16xf32>
    %100 = arith.mulf %98, %1 : vector<8x16xf32>
    %101 = arith.addf %99, %100 : vector<8x16xf32>
    %cst_47 = arith.constant 2.500000e-01 : f32
    %102 = vector.broadcast %cst_47 : f32 to vector<8x16xf32>
    %103 = arith.mulf %101, %102 : vector<8x16xf32>
    %104 = arith.truncf %103 : vector<8x16xf32> to vector<8x16xbf16>
    %c0_48 = arith.constant 0 : index
    %c3 = arith.constant 3 : index
    %c0_49 = arith.constant 0 : index
    %c0_50 = arith.constant 0 : index
    %105 = vector.load %arg6[%c0_48, %c3, %c0_49, %c0_50] : memref<1x4x8x16xbf16, #tpu.memory_space<vmem>>, vector<1x1x8x16xbf16>
    %106 = vector.shape_cast %105 : vector<1x1x8x16xbf16> to vector<8x16xbf16>
    %107 = vector.shape_cast %104 : vector<8x16xbf16> to vector<1x1x8x16xbf16>
    tpu.vector_store %arg6[%c0_48, %c3, %c0_49, %c0_50], %107 {strides = array<i32>} : memref<1x4x8x16xbf16, #tpu.memory_space<vmem>>, vector<1x1x8x16xbf16>,
    %108 = vector.extract_strided_slice %7 {offsets = [0, 112], sizes = [8, 16], strides = [1, 1]} : vector<8x192xf32> to vector<8x16xf32>
    %109 = vector.extract_strided_slice %108 {offsets = [0, 8], sizes = [8, 8], strides = [1, 1]} : vector<8x16xf32> to vector<8x8xf32>
    %110 = vector.extract_strided_slice %108 {offsets = [0, 0], sizes = [8, 8], strides = [1, 1]} : vector<8x16xf32> to vector<8x8xf32>
    %111 = tpu.concatenate %109, %110 in 1 : vector<8x8xf32>, vector<8x8xf32> -> vector<8x16xf32>
    %112 = arith.mulf %108, %3 : vector<8x16xf32>
    %113 = arith.mulf %111, %1 : vector<8x16xf32>
    %114 = arith.addf %112, %113 : vector<8x16xf32>
    %115 = arith.truncf %114 : vector<8x16xf32> to vector<8x16xbf16>
    %c0_51 = arith.constant 0 : index
    %c3_52 = arith.constant 3 : index
    %c0_53 = arith.constant 0 : index
    %c0_54 = arith.constant 0 : index
    %116 = vector.load %arg7[%c0_51, %c3_52, %c0_53, %c0_54] : memref<1x4x8x16xbf16, #tpu.memory_space<vmem>>, vector<1x1x8x16xbf16>
    %117 = vector.shape_cast %116 : vector<1x1x8x16xbf16> to vector<8x16xbf16>
    %118 = vector.shape_cast %115 : vector<8x16xbf16> to vector<1x1x8x16xbf16>
    tpu.vector_store %arg7[%c0_51, %c3_52, %c0_53, %c0_54], %118 {strides = array<i32>} : memref<1x4x8x16xbf16, #tpu.memory_space<vmem>>, vector<1x1x8x16xbf16>,
    %119 = vector.extract_strided_slice %7 {offsets = [0, 176], sizes = [8, 16], strides = [1, 1]} : vector<8x192xf32> to vector<8x16xf32>
    %120 = arith.truncf %119 : vector<8x16xf32> to vector<8x16xbf16>
    %c0_55 = arith.constant 0 : index
    %c3_56 = arith.constant 3 : index
    %c0_57 = arith.constant 0 : index
    %c0_58 = arith.constant 0 : index
    %121 = vector.load %arg8[%c0_55, %c3_56, %c0_57, %c0_58] : memref<1x4x8x16xbf16, #tpu.memory_space<vmem>>, vector<1x1x8x16xbf16>
    %122 = vector.shape_cast %121 : vector<1x1x8x16xbf16> to vector<8x16xbf16>
    %123 = vector.shape_cast %120 : vector<8x16xbf16> to vector<1x1x8x16xbf16>
    tpu.vector_store %arg8[%c0_55, %c3_56, %c0_57, %c0_58], %123 {strides = array<i32>} : memref<1x4x8x16xbf16, #tpu.memory_space<vmem>>, vector<1x1x8x16xbf16>,
    return
  }
  func.func @transform_0(%arg0: i32, %arg1: i32) -> (i32, i32, i32) {
    %c0_i32 = arith.constant 0 : i32
    %c0_i32_0 = arith.constant 0 : i32
    return %arg0, %arg1, %c0_i32 : i32, i32, i32
  }
  func.func @transform_1(%arg0: i32, %arg1: i32) -> (i32, i32) {
    %c0_i32 = arith.constant 0 : i32
    %c0_i32_0 = arith.constant 0 : i32
    %c0_i32_1 = arith.constant 0 : i32
    return %c0_i32, %c0_i32_0 : i32, i32
  }
  func.func @transform_2(%arg0: i32, %arg1: i32) -> (i32, i32, i32) {
    %c0_i32 = arith.constant 0 : i32
    %c0_i32_0 = arith.constant 0 : i32
    return %arg0, %arg1, %c0_i32 : i32, i32, i32
  }
  func.func @transform_3(%arg0: i32, %arg1: i32) -> (i32, i32, i32) {
    %c0_i32 = arith.constant 0 : i32
    %c0_i32_0 = arith.constant 0 : i32
    return %arg0, %arg1, %c0_i32 : i32, i32, i32
  }
  func.func @transform_4(%arg0: i32, %arg1: i32) -> (i32, i32, i32, i32) {
    %c0_i32 = arith.constant 0 : i32
    %c0_i32_0 = arith.constant 0 : i32
    %c0_i32_1 = arith.constant 0 : i32
    return %arg0, %c0_i32, %arg1, %c0_i32_0 : i32, i32, i32, i32
  }
  func.func @transform_5(%arg0: i32, %arg1: i32) -> (i32, i32, i32, i32) {
    %c0_i32 = arith.constant 0 : i32
    %c0_i32_0 = arith.constant 0 : i32
    %c0_i32_1 = arith.constant 0 : i32
    return %arg0, %c0_i32, %arg1, %c0_i32_0 : i32, i32, i32, i32
  }
  func.func @transform_6(%arg0: i32, %arg1: i32) -> (i32, i32, i32, i32) {
    %c0_i32 = arith.constant 0 : i32
    %c0_i32_0 = arith.constant 0 : i32
    %c0_i32_1 = arith.constant 0 : i32
    return %arg0, %c0_i32, %arg1, %c0_i32_0 : i32, i32, i32, i32
  }
}

module attributes {stable_mosaic.version = 11 : i64} {
  func.func @qkv_rope_kernel(%arg0: i32, %arg1: i32, %arg2: memref<1x8x32xbf16, #tpu.memory_space<vmem>>, %arg3: memref<32x192xbf16, #tpu.memory_space<vmem>>, %arg4: memref<1x8x16xf32, #tpu.memory_space<vmem>>, %arg5: memref<1x8x16xf32, #tpu.memory_space<vmem>>, %arg6: memref<1x4x8x16xbf16, #tpu.memory_space<vmem>>, %arg7: memref<1x4x8x16xbf16, #tpu.memory_space<vmem>>, %arg8: memref<1x4x8x16xbf16, #tpu.memory_space<vmem>>) attributes {dimension_semantics = [#tpu.dimension_semantics<parallel>, #tpu.dimension_semantics<parallel>], iteration_bounds = array<i64: 2, 1>, scalar_prefetch = 0 : i64, scratch_operands = 0 : i64, tpu.core_type = #tpu.core_type<tc>, window_params = [{transform_indices = @transform_0, window_bounds = array<i64: 1, 8, 32>}, {pipeline_mode = #tpu.pipeline_mode<synchronous>, transform_indices = @transform_1, window_bounds = array<i64: 32, 192>}, {transform_indices = @transform_2, window_bounds = array<i64: 1, 8, 16>}, {transform_indices = @transform_3, window_bounds = array<i64: 1, 8, 16>}, {transform_indices = @transform_4, window_bounds = array<i64: 1, 4, 8, 16>}, {transform_indices = @transform_5, window_bounds = array<i64: 1, 4, 8, 16>}, {transform_indices = @transform_6, window_bounds = array<i64: 1, 4, 8, 16>}]} {
    %c0 = arith.constant 0 : index
    %c0_0 = arith.constant 0 : index
    %c0_1 = arith.constant 0 : index
    %0 = vector.load %arg4[%c0, %c0_0, %c0_1] : memref<1x8x16xf32, #tpu.memory_space<vmem>>, vector<1x8x16xf32>
    %1 = vector.shape_cast %0 : vector<1x8x16xf32> to vector<8x16xf32>
    %c0_2 = arith.constant 0 : index
    %c0_3 = arith.constant 0 : index
    %c0_4 = arith.constant 0 : index
    %2 = vector.load %arg5[%c0_2, %c0_3, %c0_4] : memref<1x8x16xf32, #tpu.memory_space<vmem>>, vector<1x8x16xf32>
    %3 = vector.shape_cast %2 : vector<1x8x16xf32> to vector<8x16xf32>
    %c0_5 = arith.constant 0 : index
    %c0_6 = arith.constant 0 : index
    %c0_7 = arith.constant 0 : index
    %4 = vector.load %arg2[%c0_5, %c0_6, %c0_7] : memref<1x8x32xbf16, #tpu.memory_space<vmem>>, vector<1x8x32xbf16>
    %5 = vector.shape_cast %4 : vector<1x8x32xbf16> to vector<8x32xbf16>
    %c0_8 = arith.constant 0 : index
    %c0_9 = arith.constant 0 : index
    %6 = vector.load %arg3[%c0_8, %c0_9] : memref<32x192xbf16, #tpu.memory_space<vmem>>, vector<32x192xbf16>
    %cst = arith.constant dense<0.000000e+00> : vector<8x192xf32>
    %7 = tpu.matmul %5, %6, %cst {dimension_numbers = #tpu.dot_dimension_numbers<[1], [0], [0], [1], [0, 0, 1, 1], [], []>} : vector<8x32xbf16>, vector<32x192xbf16>, vector<8x192xf32> -> vector<8x192xf32>
    %8 = vector.extract_strided_slice %7 {offsets = [0, 0], sizes = [8, 16], strides = [1, 1]} : vector<8x192xf32> to vector<8x16xf32>
    %9 = vector.extract_strided_slice %8 {offsets = [0, 8], sizes = [8, 8], strides = [1, 1]} : vector<8x16xf32> to vector<8x8xf32>
    %10 = vector.extract_strided_slice %8 {offsets = [0, 0], sizes = [8, 8], strides = [1, 1]} : vector<8x16xf32> to vector<8x8xf32>
    %11 = tpu.concatenate %9, %10 in 1 : vector<8x8xf32>, vector<8x8xf32> -> vector<8x16xf32>
    %12 = arith.mulf %8, %3 : vector<8x16xf32>
    %13 = arith.mulf %11, %1 : vector<8x16xf32>
    %14 = arith.addf %12, %13 : vector<8x16xf32>
    %cst_10 = arith.constant 2.500000e-01 : f32
    %15 = vector.broadcast %cst_10 : f32 to vector<8x16xf32>
    %16 = arith.mulf %14, %15 : vector<8x16xf32>
    %17 = arith.truncf %16 : vector<8x16xf32> to vector<8x16xbf16>
    %c0_11 = arith.constant 0 : index
    %c0_12 = arith.constant 0 : index
    %c0_13 = arith.constant 0 : index
    %c0_14 = arith.constant 0 : index
    %18 = vector.load %arg6[%c0_11, %c0_12, %c0_13, %c0_14] : memref<1x4x8x16xbf16, #tpu.memory_space<vmem>>, vector<1x1x8x16xbf16>
    %19 = vector.shape_cast %18 : vector<1x1x8x16xbf16> to vector<8x16xbf16>
    %20 = vector.shape_cast %17 : vector<8x16xbf16> to vector<1x1x8x16xbf16>
    tpu.vector_store %arg6[%c0_11, %c0_12, %c0_13, %c0_14], %20 {strides = array<i32>} : memref<1x4x8x16xbf16, #tpu.memory_space<vmem>>, vector<1x1x8x16xbf16>,
    %21 = vector.extract_strided_slice %7 {offsets = [0, 64], sizes = [8, 16], strides = [1, 1]} : vector<8x192xf32> to vector<8x16xf32>
    %22 = vector.extract_strided_slice %21 {offsets = [0, 8], sizes = [8, 8], strides = [1, 1]} : vector<8x16xf32> to vector<8x8xf32>
    %23 = vector.extract_strided_slice %21 {offsets = [0, 0], sizes = [8, 8], strides = [1, 1]} : vector<8x16xf32> to vector<8x8xf32>
    %24 = tpu.concatenate %22, %23 in 1 : vector<8x8xf32>, vector<8x8xf32> -> vector<8x16xf32>
    %25 = arith.mulf %21, %3 : vector<8x16xf32>
    %26 = arith.mulf %24, %1 : vector<8x16xf32>
    %27 = arith.addf %25, %26 : vector<8x16xf32>
    %28 = arith.truncf %27 : vector<8x16xf32> to vector<8x16xbf16>
    %c0_15 = arith.constant 0 : index
    %c0_16 = arith.constant 0 : index
    %c0_17 = arith.constant 0 : index
    %c0_18 = arith.constant 0 : index
    %29 = vector.load %arg7[%c0_15, %c0_16, %c0_17, %c0_18] : memref<1x4x8x16xbf16, #tpu.memory_space<vmem>>, vector<1x1x8x16xbf16>
    %30 = vector.shape_cast %29 : vector<1x1x8x16xbf16> to vector<8x16xbf16>
    %31 = vector.shape_cast %28 : vector<8x16xbf16> to vector<1x1x8x16xbf16>
    tpu.vector_store %arg7[%c0_15, %c0_16, %c0_17, %c0_18], %31 {strides = array<i32>} : memref<1x4x8x16xbf16, #tpu.memory_space<vmem>>, vector<1x1x8x16xbf16>,
    %32 = vector.extract_strided_slice %7 {offsets = [0, 128], sizes = [8, 16], strides = [1, 1]} : vector<8x192xf32> to vector<8x16xf32>
    %33 = arith.truncf %32 : vector<8x16xf32> to vector<8x16xbf16>
    %c0_19 = arith.constant 0 : index
    %c0_20 = arith.constant 0 : index
    %c0_21 = arith.constant 0 : index
    %c0_22 = arith.constant 0 : index
    %34 = vector.load %arg8[%c0_19, %c0_20, %c0_21, %c0_22] : memref<1x4x8x16xbf16, #tpu.memory_space<vmem>>, vector<1x1x8x16xbf16>
    %35 = vector.shape_cast %34 : vector<1x1x8x16xbf16> to vector<8x16xbf16>
    %36 = vector.shape_cast %33 : vector<8x16xbf16> to vector<1x1x8x16xbf16>
    tpu.vector_store %arg8[%c0_19, %c0_20, %c0_21, %c0_22], %36 {strides = array<i32>} : memref<1x4x8x16xbf16, #tpu.memory_space<vmem>>, vector<1x1x8x16xbf16>,
    %37 = vector.extract_strided_slice %7 {offsets = [0, 16], sizes = [8, 16], strides = [1, 1]} : vector<8x192xf32> to vector<8x16xf32>
    %38 = vector.extract_strided_slice %37 {offsets = [0, 8], sizes = [8, 8], strides = [1, 1]} : vector<8x16xf32> to vector<8x8xf32>
    %39 = vector.extract_strided_slice %37 {offsets = [0, 0], sizes = [8, 8], strides = [1, 1]} : vector<8x16xf32> to vector<8x8xf32>
    %40 = tpu.concatenate %38, %39 in 1 : vector<8x8xf32>, vector<8x8xf32> -> vector<8x16xf32>
    %41 = arith.mulf %37, %3 : vector<8x16xf32>
    %42 = arith.mulf %40, %1 : vector<8x16xf32>
    %43 = arith.addf %41, %42 : vector<8x16xf32>
    %cst_23 = arith.constant 2.500000e-01 : f32
    %44 = vector.broadcast %cst_23 : f32 to vector<8x16xf32>
    %45 = arith.mulf %43, %44 : vector<8x16xf32>
    %46 = arith.truncf %45 : vector<8x16xf32> to vector<8x16xbf16>
    %c0_24 = arith.constant 0 : index
    %c1 = arith.constant 1 : index
    %c0_25 = arith.constant 0 : index
    %c0_26 = arith.constant 0 : index
    %47 = vector.load %arg6[%c0_24, %c1, %c0_25, %c0_26] : memref<1x4x8x16xbf16, #tpu.memory_space<vmem>>, vector<1x1x8x16xbf16>
    %48 = vector.shape_cast %47 : vector<1x1x8x16xbf16> to vector<8x16xbf16>
    %49 = vector.shape_cast %46 : vector<8x16xbf16> to vector<1x1x8x16xbf16>
    tpu.vector_store %arg6[%c0_24, %c1, %c0_25, %c0_26], %49 {strides = array<i32>} : memref<1x4x8x16xbf16, #tpu.memory_space<vmem>>, vector<1x1x8x16xbf16>,
    %50 = vector.extract_strided_slice %7 {offsets = [0, 80], sizes = [8, 16], strides = [1, 1]} : vector<8x192xf32> to vector<8x16xf32>
    %51 = vector.extract_strided_slice %50 {offsets = [0, 8], sizes = [8, 8], strides = [1, 1]} : vector<8x16xf32> to vector<8x8xf32>
    %52 = vector.extract_strided_slice %50 {offsets = [0, 0], sizes = [8, 8], strides = [1, 1]} : vector<8x16xf32> to vector<8x8xf32>
    %53 = tpu.concatenate %51, %52 in 1 : vector<8x8xf32>, vector<8x8xf32> -> vector<8x16xf32>
    %54 = arith.mulf %50, %3 : vector<8x16xf32>
    %55 = arith.mulf %53, %1 : vector<8x16xf32>
    %56 = arith.addf %54, %55 : vector<8x16xf32>
    %57 = arith.truncf %56 : vector<8x16xf32> to vector<8x16xbf16>
    %c0_27 = arith.constant 0 : index
    %c1_28 = arith.constant 1 : index
    %c0_29 = arith.constant 0 : index
    %c0_30 = arith.constant 0 : index
    %58 = vector.load %arg7[%c0_27, %c1_28, %c0_29, %c0_30] : memref<1x4x8x16xbf16, #tpu.memory_space<vmem>>, vector<1x1x8x16xbf16>
    %59 = vector.shape_cast %58 : vector<1x1x8x16xbf16> to vector<8x16xbf16>
    %60 = vector.shape_cast %57 : vector<8x16xbf16> to vector<1x1x8x16xbf16>
    tpu.vector_store %arg7[%c0_27, %c1_28, %c0_29, %c0_30], %60 {strides = array<i32>} : memref<1x4x8x16xbf16, #tpu.memory_space<vmem>>, vector<1x1x8x16xbf16>,
    %61 = vector.extract_strided_slice %7 {offsets = [0, 144], sizes = [8, 16], strides = [1, 1]} : vector<8x192xf32> to vector<8x16xf32>
    %62 = arith.truncf %61 : vector<8x16xf32> to vector<8x16xbf16>
    %c0_31 = arith.constant 0 : index
    %c1_32 = arith.constant 1 : index
    %c0_33 = arith.constant 0 : index
    %c0_34 = arith.constant 0 : index
    %63 = vector.load %arg8[%c0_31, %c1_32, %c0_33, %c0_34] : memref<1x4x8x16xbf16, #tpu.memory_space<vmem>>, vector<1x1x8x16xbf16>
    %64 = vector.shape_cast %63 : vector<1x1x8x16xbf16> to vector<8x16xbf16>
    %65 = vector.shape_cast %62 : vector<8x16xbf16> to vector<1x1x8x16xbf16>
    tpu.vector_store %arg8[%c0_31, %c1_32, %c0_33, %c0_34], %65 {strides = array<i32>} : memref<1x4x8x16xbf16, #tpu.memory_space<vmem>>, vector<1x1x8x16xbf16>,
    %66 = vector.extract_strided_slice %7 {offsets = [0, 32], sizes = [8, 16], strides = [1, 1]} : vector<8x192xf32> to vector<8x16xf32>
    %67 = vector.extract_strided_slice %66 {offsets = [0, 8], sizes = [8, 8], strides = [1, 1]} : vector<8x16xf32> to vector<8x8xf32>
    %68 = vector.extract_strided_slice %66 {offsets = [0, 0], sizes = [8, 8], strides = [1, 1]} : vector<8x16xf32> to vector<8x8xf32>
    %69 = tpu.concatenate %67, %68 in 1 : vector<8x8xf32>, vector<8x8xf32> -> vector<8x16xf32>
    %70 = arith.mulf %66, %3 : vector<8x16xf32>
    %71 = arith.mulf %69, %1 : vector<8x16xf32>
    %72 = arith.addf %70, %71 : vector<8x16xf32>
    %cst_35 = arith.constant 2.500000e-01 : f32
    %73 = vector.broadcast %cst_35 : f32 to vector<8x16xf32>
    %74 = arith.mulf %72, %73 : vector<8x16xf32>
    %75 = arith.truncf %74 : vector<8x16xf32> to vector<8x16xbf16>
    %c0_36 = arith.constant 0 : index
    %c2 = arith.constant 2 : index
    %c0_37 = arith.constant 0 : index
    %c0_38 = arith.constant 0 : index
    %76 = vector.load %arg6[%c0_36, %c2, %c0_37, %c0_38] : memref<1x4x8x16xbf16, #tpu.memory_space<vmem>>, vector<1x1x8x16xbf16>
    %77 = vector.shape_cast %76 : vector<1x1x8x16xbf16> to vector<8x16xbf16>
    %78 = vector.shape_cast %75 : vector<8x16xbf16> to vector<1x1x8x16xbf16>
    tpu.vector_store %arg6[%c0_36, %c2, %c0_37, %c0_38], %78 {strides = array<i32>} : memref<1x4x8x16xbf16, #tpu.memory_space<vmem>>, vector<1x1x8x16xbf16>,
    %79 = vector.extract_strided_slice %7 {offsets = [0, 96], sizes = [8, 16], strides = [1, 1]} : vector<8x192xf32> to vector<8x16xf32>
    %80 = vector.extract_strided_slice %79 {offsets = [0, 8], sizes = [8, 8], strides = [1, 1]} : vector<8x16xf32> to vector<8x8xf32>
    %81 = vector.extract_strided_slice %79 {offsets = [0, 0], sizes = [8, 8], strides = [1, 1]} : vector<8x16xf32> to vector<8x8xf32>
    %82 = tpu.concatenate %80, %81 in 1 : vector<8x8xf32>, vector<8x8xf32> -> vector<8x16xf32>
    %83 = arith.mulf %79, %3 : vector<8x16xf32>
    %84 = arith.mulf %82, %1 : vector<8x16xf32>
    %85 = arith.addf %83, %84 : vector<8x16xf32>
    %86 = arith.truncf %85 : vector<8x16xf32> to vector<8x16xbf16>
    %c0_39 = arith.constant 0 : index
    %c2_40 = arith.constant 2 : index
    %c0_41 = arith.constant 0 : index
    %c0_42 = arith.constant 0 : index
    %87 = vector.load %arg7[%c0_39, %c2_40, %c0_41, %c0_42] : memref<1x4x8x16xbf16, #tpu.memory_space<vmem>>, vector<1x1x8x16xbf16>
    %88 = vector.shape_cast %87 : vector<1x1x8x16xbf16> to vector<8x16xbf16>
    %89 = vector.shape_cast %86 : vector<8x16xbf16> to vector<1x1x8x16xbf16>
    tpu.vector_store %arg7[%c0_39, %c2_40, %c0_41, %c0_42], %89 {strides = array<i32>} : memref<1x4x8x16xbf16, #tpu.memory_space<vmem>>, vector<1x1x8x16xbf16>,
    %90 = vector.extract_strided_slice %7 {offsets = [0, 160], sizes = [8, 16], strides = [1, 1]} : vector<8x192xf32> to vector<8x16xf32>
    %91 = arith.truncf %90 : vector<8x16xf32> to vector<8x16xbf16>
    %c0_43 = arith.constant 0 : index
    %c2_44 = arith.constant 2 : index
    %c0_45 = arith.constant 0 : index
    %c0_46 = arith.constant 0 : index
    %92 = vector.load %arg8[%c0_43, %c2_44, %c0_45, %c0_46] : memref<1x4x8x16xbf16, #tpu.memory_space<vmem>>, vector<1x1x8x16xbf16>
    %93 = vector.shape_cast %92 : vector<1x1x8x16xbf16> to vector<8x16xbf16>
    %94 = vector.shape_cast %91 : vector<8x16xbf16> to vector<1x1x8x16xbf16>
    tpu.vector_store %arg8[%c0_43, %c2_44, %c0_45, %c0_46], %94 {strides = array<i32>} : memref<1x4x8x16xbf16, #tpu.memory_space<vmem>>, vector<1x1x8x16xbf16>,
    %95 = vector.extract_strided_slice %7 {offsets = [0, 48], sizes = [8, 16], strides = [1, 1]} : vector<8x192xf32> to vector<8x16xf32>
    %96 = vector.extract_strided_slice %95 {offsets = [0, 8], sizes = [8, 8], strides = [1, 1]} : vector<8x16xf32> to vector<8x8xf32>
    %97 = vector.extract_strided_slice %95 {offsets = [0, 0], sizes = [8, 8], strides = [1, 1]} : vector<8x16xf32> to vector<8x8xf32>
    %98 = tpu.concatenate %96, %97 in 1 : vector<8x8xf32>, vector<8x8xf32> -> vector<8x16xf32>
    %99 = arith.mulf %95, %3 : vector<8x16xf32>
    %100 = arith.mulf %98, %1 : vector<8x16xf32>
    %101 = arith.addf %99, %100 : vector<8x16xf32>
    %cst_47 = arith.constant 2.500000e-01 : f32
    %102 = vector.broadcast %cst_47 : f32 to vector<8x16xf32>
    %103 = arith.mulf %101, %102 : vector<8x16xf32>
    %104 = arith.truncf %103 : vector<8x16xf32> to vector<8x16xbf16>
    %c0_48 = arith.constant 0 : index
    %c3 = arith.constant 3 : index
    %c0_49 = arith.constant 0 : index
    %c0_50 = arith.constant 0 : index
    %105 = vector.load %arg6[%c0_48, %c3, %c0_49, %c0_50] : memref<1x4x8x16xbf16, #tpu.memory_space<vmem>>, vector<1x1x8x16xbf16>
    %106 = vector.shape_cast %105 : vector<1x1x8x16xbf16> to vector<8x16xbf16>
    %107 = vector.shape_cast %104 : vector<8x16xbf16> to vector<1x1x8x16xbf16>
    tpu.vector_store %arg6[%c0_48, %c3, %c0_49, %c0_50], %107 {strides = array<i32>} : memref<1x4x8x16xbf16, #tpu.memory_space<vmem>>, vector<1x1x8x16xbf16>,
    %108 = vector.extract_strided_slice %7 {offsets = [0, 112], sizes = [8, 16], strides = [1, 1]} : vector<8x192xf32> to vector<8x16xf32>
    %109 = vector.extract_strided_slice %108 {offsets = [0, 8], sizes = [8, 8], strides = [1, 1]} : vector<8x16xf32> to vector<8x8xf32>
    %110 = vector.extract_strided_slice %108 {offsets = [0, 0], sizes = [8, 8], strides = [1, 1]} : vector<8x16xf32> to vector<8x8xf32>
    %111 = tpu.concatenate %109, %110 in 1 : vector<8x8xf32>, vector<8x8xf32> -> vector<8x16xf32>
    %112 = arith.mulf %108, %3 : vector<8x16xf32>
    %113 = arith.mulf %111, %1 : vector<8x16xf32>
    %114 = arith.addf %112, %113 : vector<8x16xf32>
    %115 = arith.truncf %114 : vector<8x16xf32> to vector<8x16xbf16>
    %c0_51 = arith.constant 0 : index
    %c3_52 = arith.constant 3 : index
    %c0_53 = arith.constant 0 : index
    %c0_54 = arith.constant 0 : index
    %116 = vector.load %arg7[%c0_51, %c3_52, %c0_53, %c0_54] : memref<1x4x8x16xbf16, #tpu.memory_space<vmem>>, vector<1x1x8x16xbf16>
    %117 = vector.shape_cast %116 : vector<1x1x8x16xbf16> to vector<8x16xbf16>
    %118 = vector.shape_cast %115 : vector<8x16xbf16> to vector<1x1x8x16xbf16>
    tpu.vector_store %arg7[%c0_51, %c3_52, %c0_53, %c0_54], %118 {strides = array<i32>} : memref<1x4x8x16xbf16, #tpu.memory_space<vmem>>, vector<1x1x8x16xbf16>,
    %119 = vector.extract_strided_slice %7 {offsets = [0, 176], sizes = [8, 16], strides = [1, 1]} : vector<8x192xf32> to vector<8x16xf32>
    %120 = arith.truncf %119 : vector<8x16xf32> to vector<8x16xbf16>
    %c0_55 = arith.constant 0 : index
    %c3_56 = arith.constant 3 : index
    %c0_57 = arith.constant 0 : index
    %c0_58 = arith.constant 0 : index
    %121 = vector.load %arg8[%c0_55, %c3_56, %c0_57, %c0_58] : memref<1x4x8x16xbf16, #tpu.memory_space<vmem>>, vector<1x1x8x16xbf16>
    %122 = vector.shape_cast %121 : vector<1x1x8x16xbf16> to vector<8x16xbf16>
    %123 = vector.shape_cast %120 : vector<8x16xbf16> to vector<1x1x8x16xbf16>
    tpu.vector_store %arg8[%c0_55, %c3_56, %c0_57, %c0_58], %123 {strides = array<i32>} : memref<1x4x8x16xbf16, #tpu.memory_space<vmem>>, vector<1x1x8x16xbf16>,
    return
  }
  func.func @transform_0(%arg0: i32, %arg1: i32) -> (i32, i32, i32) {
    %c0_i32 = arith.constant 0 : i32
    %c0_i32_0 = arith.constant 0 : i32
    return %arg0, %arg1, %c0_i32 : i32, i32, i32
  }
  func.func @transform_1(%arg0: i32, %arg1: i32) -> (i32, i32) {
    %c0_i32 = arith.constant 0 : i32
    %c0_i32_0 = arith.constant 0 : i32
    %c0_i32_1 = arith.constant 0 : i32
    return %c0_i32, %c0_i32_0 : i32, i32
  }
  func.func @transform_2(%arg0: i32, %arg1: i32) -> (i32, i32, i32) {
    %c0_i32 = arith.constant 0 : i32
    %c0_i32_0 = arith.constant 0 : i32
    return %arg0, %arg1, %c0_i32 : i32, i32, i32
  }
  func.func @transform_3(%arg0: i32, %arg1: i32) -> (i32, i32, i32) {
    %c0_i32 = arith.constant 0 : i32
    %c0_i32_0 = arith.constant 0 : i32
    return %arg0, %arg1, %c0_i32 : i32, i32, i32
  }
  func.func @transform_4(%arg0: i32, %arg1: i32) -> (i32, i32, i32, i32) {
    %c0_i32 = arith.constant 0 : i32
    %c0_i32_0 = arith.constant 0 : i32
    %c0_i32_1 = arith.constant 0 : i32
    return %arg0, %c0_i32, %arg1, %c0_i32_0 : i32, i32, i32, i32
  }
  func.func @transform_5(%arg0: i32, %arg1: i32) -> (i32, i32, i32, i32) {
    %c0_i32 = arith.constant 0 : i32
    %c0_i32_0 = arith.constant 0 : i32
    %c0_i32_1 = arith.constant 0 : i32
    return %arg0, %c0_i32, %arg1, %c0_i32_0 : i32, i32, i32, i32
  }
  func.func @transform_6(%arg0: i32, %arg1: i32) -> (i32, i32, i32, i32) {
    %c0_i32 = arith.constant 0 : i32
    %c0_i32_0 = arith.constant 0 : i32
    %c0_i32_1 = arith.constant 0 : i32
    return %arg0, %c0_i32, %arg1, %c0_i32_0 : i32, i32, i32, i32
  }
}

</mosaic_0001>

<llo_original>
// kernel: tpu_custom_call.1
$region0: #{tpu_custom_call.1}
  #allocation0 [shape = 'u32[]', space=smem, size = 0x4, offset = 0x4, fixed_abs, tag = 'smem constant byte address 0x4 - core index']
  #allocation1 [shape = 'u32[144,128]{1,0:T(1,128)}', space=vmem, size = 0x12000, scoped, tag = 'internal scratch']
  %s0 = inlined_call_operand.hbm [shape: bf16[2,8,32], index: 0, kind: input, shape index: {}]
  %s1 = inlined_call_operand.hbm [shape: bf16[32,192], index: 1, kind: input, shape index: {}]
  %s2 = inlined_call_operand.hbm [shape: f32[2,8,16], index: 2, kind: input, shape index: {}]
  %s3 = inlined_call_operand.hbm [shape: f32[2,8,16], index: 3, kind: input, shape index: {}]
  %s4 = inlined_call_operand.hbm [shape: bf16[2,4,8,16], index: 4, kind: output, shape index: {0}]
  %s5 = inlined_call_operand.hbm [shape: bf16[2,4,8,16], index: 5, kind: output, shape index: {1}]
  %s6 = inlined_call_operand.hbm [shape: bf16[2,4,8,16], index: 6, kind: output, shape index: {2}]
  %7 = xla_tuple %s4, %s5, %s6
  %s8 = sld [smem:[#allocation0]]
  $region81: #{tpu_custom_call.1} parent=0
    _
  %s10 = ssub.s32 1, %s8
  %s11 = scalar_select 0, %s10, %s8
  $region1: #{tpu_custom_call.1} parent=0
    #allocation2 [shape = 'u8[4096]{0}', space=vmem, size = 0x1000, scoped, tag = 'input window, operand 0']
    #allocation3 [shape = 's32[2]{0}', space=sflag, size = 0x8, scoped, tag = 'scoped memory for tpu_custom_call.1']
    #allocation4 [shape = 's32[2]{0}', space=sflag, size = 0x8, scoped, tag = 'scoped memory for tpu_custom_call.1']
    #allocation5 [shape = 'u8[16384]{0}', space=vmem, size = 0x4000, scoped, tag = 'input window, operand 1, single buffered']
    #allocation6 [shape = 's32[1]{0}', space=sflag, size = 0x4, scoped, tag = 'scoped memory for tpu_custom_call.1']
    #allocation7 [shape = 'u8[8192]{0}', space=vmem, size = 0x2000, scoped, tag = 'input window, operand 2']
    #allocation8 [shape = 'u8[8192]{0}', space=vmem, size = 0x2000, scoped, tag = 'input window, operand 3']
    #allocation9 [shape = 'u8[16384]{0}', space=vmem, size = 0x4000, scoped, tag = 'output window, operand 0']
    #allocation10 [shape = 'u8[16384]{0}', space=vmem, size = 0x4000, scoped, tag = 'output window, operand 1']
    #allocation11 [shape = 's32[2]{0}', space=sflag, size = 0x8, scoped, tag = 'scoped memory for tpu_custom_call.1']
    #allocation12 [shape = 'u8[16384]{0}', space=vmem, size = 0x4000, scoped, tag = 'output window, operand 2']
    %12 = vsyncpa [#allocation3], 0
    %s13 = scalar_lea.sflag [#allocation3], 1
    %14 = vsyncpa %s13, 0
    %15 = vsyncpa [#allocation6], 0
    %16 = vsyncpa [#allocation4], 0
    %s17 = scalar_lea.sflag [#allocation4], 1
    %18 = vsyncpa %s17, 0
    %19 = vsyncpa [#allocation11], 0
    %s20 = scalar_lea.sflag [#allocation11], 1
    %21 = vsyncpa %s20, 0
    loop: start=0, step=1, limit=4
    $region2: #{tpu_custom_call.1} parent=1 // loop_pre_header
      _
    $region3: #{tpu_custom_call.1} parent=1 // loop_header
      %s23 = sphi 0, %s27
      %p24 = scmp.ge.s32.totalorder %s23, 4
      %s30 = sphi 0, %s42
      %s31 = sphi 0, %s38
      %s32 = sphi 0, %s30
      %s33 = sphi 0, %s31
      %s34 = sphi 0, %s32
      %s35 = sphi 0, %s33
      %s47 = sphi 0, %s49
      %s50 = sphi 0, %s47
      %s51 = sphi 0, %s50
      %s67 = sphi 0, %s51
      %s71 = sphi 0, %s71
      %s73 = sphi 0, %s71
      %s74 = sphi 0, %s73
      %s88 = sphi 0, %s74
      %s96 = sphi 0, %s98
      %s99 = sphi 0, %s96
      %s100 = sphi 0, %s99
      %s116 = sphi 0, %s100
      %s124 = sphi 0, %s126
      %s127 = sphi 0, %s124
      %s128 = sphi 0, %s127
      %s144 = sphi 0, %s128
      %s152 = sphi 0, %s154
      %s155 = sphi 0, %s152
      %s156 = sphi 0, %s155
      %s172 = sphi 0, %s156
      %s180 = sphi 0, %s182
      %s183 = sphi 0, %s180
      %s184 = sphi 0, %s183
      %s200 = sphi 0, %s184
      %s208 = sphi 0, %s210
      %s211 = sphi 0, %s208
      %s212 = sphi 0, %s211
      %s228 = sphi 0, %s212
    $region4: #{tpu_custom_call.1} parent=1 // loop_header_branch
      %26 = sbr.rel (%p24) target = $region8
    $region5: #{tpu_custom_call.1} parent=1 // loop_body
      %s28 = ssub.s32 %s23, 1
      %s29 = ssub.s32 %s23, 2
      %s36 = sadd.s32 1, %s31
      %p37 = scmp.ge.s32.totalorder %s36, 1
      %s38 = scalar_select %p37, 0, %s36
      %s39 = sadd.s32 1, %s30
      %s40 = scalar_select %p37, %s39, %s30
      %p41 = scmp.ge.s32.totalorder %s40, 2
      %s42 = scalar_select %p41, 0, %s40
      %s43 = ssub.s32 %s30, %s42
      %s44 = ssub.s32 %s31, %s38
      %s45 = sor.u32 %s43, %s44
      %p46 = scmp.eq.s32.totalorder %s45, 0
      %s48 = sadd.s32 %s47, 1
      %s49 = scalar_select %p46, %s47, %s48
      %p52 = pneg %p46
      %p53 = scmp.eq.s32.totalorder %s23, 1
      %p54 = por %p52, %p53
      %p55 = scmp.ne.s32.totalorder %s47, %s50
      %p56 = scmp.eq.s32.totalorder %s23, 0
      %p57 = por %p55, %p56
      %p58 = scmp.ne.s32.totalorder %s47, %s50
      %p59 = scmp.eq.s32.totalorder %s28, 1
      %p60 = por %p58, %p59
      %p61 = scmp.ne.s32.totalorder %s50, %s51
      %p62 = scmp.eq.s32.totalorder %s28, 0
      %p63 = por %p61, %p62
      %p64 = scmp.ne.s32.totalorder %s50, %s51
      %p65 = scmp.eq.s32.totalorder %s29, 1
      %p66 = por %p64, %p65
      %p68 = scmp.ne.s32.totalorder %s51, %s67
      %p69 = scmp.eq.s32.totalorder %s29, 0
      %p70 = por %p68, %p69
      %s72 = sadd.s32 %s71, 1
      %p75 = scmp.eq.s32.totalorder %s23, 1
      %p76 = scmp.ne.s32.totalorder %s71, %s73
      %p77 = scmp.eq.s32.totalorder %s23, 0
      %p78 = por %p76, %p77
      %p79 = scmp.ne.s32.totalorder %s71, %s73
      %p80 = scmp.eq.s32.totalorder %s28, 1
      %p81 = por %p79, %p80
      %p82 = scmp.ne.s32.totalorder %s73, %s74
      %p83 = scmp.eq.s32.totalorder %s28, 0
      %p84 = por %p82, %p83
      %p85 = scmp.ne.s32.totalorder %s73, %s74
      %p86 = scmp.eq.s32.totalorder %s29, 1
      %p87 = por %p85, %p86
      %p89 = scmp.ne.s32.totalorder %s74, %s88
      %p90 = scmp.eq.s32.totalorder %s29, 0
      %p91 = por %p89, %p90
      %s92 = ssub.s32 %s30, %s42
      %s93 = ssub.s32 %s31, %s38
      %s94 = sor.u32 %s92, %s93
      %p95 = scmp.eq.s32.totalorder %s94, 0
      %s97 = sadd.s32 %s96, 1
      %s98 = scalar_select %p95, %s96, %s97
      %p101 = pneg %p95
      %p102 = scmp.eq.s32.totalorder %s23, 1
      %p103 = por %p101, %p102
      %p104 = scmp.ne.s32.totalorder %s96, %s99
      %p105 = scmp.eq.s32.totalorder %s23, 0
      %p106 = por %p104, %p105
      %p107 = scmp.ne.s32.totalorder %s96, %s99
      %p108 = scmp.eq.s32.totalorder %s28, 1
      %p109 = por %p107, %p108
      %p110 = scmp.ne.s32.totalorder %s99, %s100
      %p111 = scmp.eq.s32.totalorder %s28, 0
      %p112 = por %p110, %p111
      %p113 = scmp.ne.s32.totalorder %s99, %s100
      %p114 = scmp.eq.s32.totalorder %s29, 1
      %p115 = por %p113, %p114
      %p117 = scmp.ne.s32.totalorder %s100, %s116
      %p118 = scmp.eq.s32.totalorder %s29, 0
      %p119 = por %p117, %p118
      %s120 = ssub.s32 %s30, %s42
      %s121 = ssub.s32 %s31, %s38
      %s122 = sor.u32 %s120, %s121
      %p123 = scmp.eq.s32.totalorder %s122, 0
      %s125 = sadd.s32 %s124, 1
      %s126 = scalar_select %p123, %s124, %s125
      %p129 = pneg %p123
      %p130 = scmp.eq.s32.totalorder %s23, 1
      %p131 = por %p129, %p130
      %p132 = scmp.ne.s32.totalorder %s124, %s127
      %p133 = scmp.eq.s32.totalorder %s23, 0
      %p134 = por %p132, %p133
      %p135 = scmp.ne.s32.totalorder %s124, %s127
      %p136 = scmp.eq.s32.totalorder %s28, 1
      %p137 = por %p135, %p136
      %p138 = scmp.ne.s32.totalorder %s127, %s128
      %p139 = scmp.eq.s32.totalorder %s28, 0
      %p140 = por %p138, %p139
      %p141 = scmp.ne.s32.totalorder %s127, %s128
      %p142 = scmp.eq.s32.totalorder %s29, 1
      %p143 = por %p141, %p142
      %p145 = scmp.ne.s32.totalorder %s128, %s144
      %p146 = scmp.eq.s32.totalorder %s29, 0
      %p147 = por %p145, %p146
      %s148 = ssub.s32 %s30, %s42
      %s149 = ssub.s32 %s31, %s38
      %s150 = sor.u32 %s148, %s149
      %p151 = scmp.eq.s32.totalorder %s150, 0
      %s153 = sadd.s32 %s152, 1
      %s154 = scalar_select %p151, %s152, %s153
      %p157 = pneg %p151
      %p158 = scmp.eq.s32.totalorder %s23, 1
      %p159 = por %p157, %p158
      %p160 = scmp.ne.s32.totalorder %s152, %s155
      %p161 = scmp.eq.s32.totalorder %s23, 0
      %p162 = por %p160, %p161
      %p163 = scmp.ne.s32.totalorder %s152, %s155
      %p164 = scmp.eq.s32.totalorder %s28, 1
      %p165 = por %p163, %p164
      %p166 = scmp.ne.s32.totalorder %s155, %s156
      %p167 = scmp.eq.s32.totalorder %s28, 0
      %p168 = por %p166, %p167
      %p169 = scmp.ne.s32.totalorder %s155, %s156
      %p170 = scmp.eq.s32.totalorder %s29, 1
      %p171 = por %p169, %p170
      %p173 = scmp.ne.s32.totalorder %s156, %s172
      %p174 = scmp.eq.s32.totalorder %s29, 0
      %p175 = por %p173, %p174
      %s176 = ssub.s32 %s30, %s42
      %s177 = ssub.s32 %s31, %s38
      %s178 = sor.u32 %s176, %s177
      %p179 = scmp.eq.s32.totalorder %s178, 0
      %s181 = sadd.s32 %s180, 1
      %s182 = scalar_select %p179, %s180, %s181
      %p185 = pneg %p179
      %p186 = scmp.eq.s32.totalorder %s23, 1
      %p187 = por %p185, %p186
      %p188 = scmp.ne.s32.totalorder %s180, %s183
      %p189 = scmp.eq.s32.totalorder %s23, 0
      %p190 = por %p188, %p189
      %p191 = scmp.ne.s32.totalorder %s180, %s183
      %p192 = scmp.eq.s32.totalorder %s28, 1
      %p193 = por %p191, %p192
      %p194 = scmp.ne.s32.totalorder %s183, %s184
      %p195 = scmp.eq.s32.totalorder %s28, 0
      %p196 = por %p194, %p195
      %p197 = scmp.ne.s32.totalorder %s183, %s184
      %p198 = scmp.eq.s32.totalorder %s29, 1
      %p199 = por %p197, %p198
      %p201 = scmp.ne.s32.totalorder %s184, %s200
      %p202 = scmp.eq.s32.totalorder %s29, 0
      %p203 = por %p201, %p202
      %s204 = ssub.s32 %s30, %s42
      %s205 = ssub.s32 %s31, %s38
      %s206 = sor.u32 %s204, %s205
      %p207 = scmp.eq.s32.totalorder %s206, 0
      %s209 = sadd.s32 %s208, 1
      %s210 = scalar_select %p207, %s208, %s209
      %p213 = pneg %p207
      %p214 = scmp.eq.s32.totalorder %s23, 1
      %p215 = por %p213, %p214
      %p216 = scmp.ne.s32.totalorder %s208, %s211
      %p217 = scmp.eq.s32.totalorder %s23, 0
      %p218 = por %p216, %p217
      %p219 = scmp.ne.s32.totalorder %s208, %s211
      %p220 = scmp.eq.s32.totalorder %s28, 1
      %p221 = por %p219, %p220
      %p222 = scmp.ne.s32.totalorder %s211, %s212
      %p223 = scmp.eq.s32.totalorder %s28, 0
      %p224 = por %p222, %p223
      %p225 = scmp.ne.s32.totalorder %s211, %s212
      %p226 = scmp.eq.s32.totalorder %s29, 1
      %p227 = por %p225, %p226
      %p229 = scmp.ne.s32.totalorder %s212, %s228
      %p230 = scmp.eq.s32.totalorder %s29, 0
      %p231 = por %p229, %p230
      %p232 = scmp.le.s32.totalorder 1, %s23
      %p233 = scmp.lt.s32.totalorder %s23, 3
      %p234 = pnand %p232, %p233
      %p235 = pneg %p234
      // Predicated region
      $region9: #{tpu_custom_call.1} parent=5 // pred_check
        _
      $region10: #{tpu_custom_call.1} parent=5 // pred_check_branch
        %237 = sbr.rel (%p234) target = $region12
      $region11: #{tpu_custom_call.1} parent=5 // pred_region
        %s238 = ssub.s32 %s23, 1
        // Predicated region
        $region13: #{tpu_custom_call.1} parent=11 // pred_check
          %p239 = pneg %p84
        $region14: #{tpu_custom_call.1} parent=11 // pred_check_branch
          %241 = sbr.rel (%p239) target = $region16
        $region15: #{tpu_custom_call.1} parent=11 // pred_region
          %s243 = ssub.s32 512, 512
          %244 = vsyncadd [#allocation6], %s243
          %s245 = sshll.u32 [#allocation5], 4
          %s246 = int_to_ptr.vmem [resolvable:$true] %s245
          %251 = dma.hbm_to_vmem [thread:$0]  %s1, 512, %s246, [#allocation6], 128, 128, 8
        $region16: #{tpu_custom_call.1} parent=11 // pred_fallthru
          _
      $region12: #{tpu_custom_call.1} parent=5 // pred_fallthru
        _
      %p252 = scmp.lt.s32.totalorder %s23, 2
      // Predicated region
      $region17: #{tpu_custom_call.1} parent=5 // pred_check
        %p253 = pneg %p252
      $region18: #{tpu_custom_call.1} parent=5 // pred_check_branch
        %255 = sbr.rel (%p253) target = $region20
      $region19: #{tpu_custom_call.1} parent=5 // pred_region
        // Predicated region
        $region21: #{tpu_custom_call.1} parent=19 // pred_check
          %p256 = pneg %p57
        $region22: #{tpu_custom_call.1} parent=19 // pred_check_branch
          %258 = sbr.rel (%p256) target = $region24
        $region23: #{tpu_custom_call.1} parent=19 // pred_region
          %s259 = sand.u32 %s23, 1
          %s260 = scalar_lea.sflag [#allocation3], %s259
          %s261 = sand.u32 %s47, 1
          %s262 = smul.addr %s261, 4
          %s263 = scalar_lea.vmem [#allocation2], %s262
          %s265 = ssub.s32 64, 64
          %266 = vsyncadd %s260, %s265
          %s267 = sadd.s32 %s31, %s30
          %s268 = smul.addr %s267, 64
          %s269 = scalar_lea.hbm %s0, %s268
          %s271 = sshll.u32 %s263, 4
          %s272 = int_to_ptr.vmem [resolvable:$true] %s271
          %274 = dma.hbm_to_vmem [thread:$0]  %s269, 64, %s272, %s260
        $region24: #{tpu_custom_call.1} parent=19 // pred_fallthru
          _
        // Predicated region
        $region25: #{tpu_custom_call.1} parent=19 // pred_check
          %p275 = pneg %p106
        $region26: #{tpu_custom_call.1} parent=19 // pred_check_branch
          %277 = sbr.rel (%p275) target = $region28
        $region27: #{tpu_custom_call.1} parent=19 // pred_region
          %s278 = sand.u32 %s23, 1
          %s279 = scalar_lea.sflag [#allocation3], %s278
          %s280 = sand.u32 %s96, 1
          %s281 = smul.addr %s280, 8
          %s282 = scalar_lea.vmem [#allocation7], %s281
          %s284 = ssub.s32 128, 128
          %285 = vsyncadd %s279, %s284
          %s286 = sadd.s32 %s31, %s30
          %s287 = smul.addr %s286, 128
          %s288 = scalar_lea.hbm %s2, %s287
          %s290 = sshll.u32 %s282, 4
          %s291 = int_to_ptr.vmem [resolvable:$true] %s290
          %293 = dma.hbm_to_vmem [thread:$0]  %s288, 128, %s291, %s279
        $region28: #{tpu_custom_call.1} parent=19 // pred_fallthru
          _
        // Predicated region
        $region29: #{tpu_custom_call.1} parent=19 // pred_check
          %p294 = pneg %p134
        $region30: #{tpu_custom_call.1} parent=19 // pred_check_branch
          %296 = sbr.rel (%p294) target = $region32
        $region31: #{tpu_custom_call.1} parent=19 // pred_region
          %s297 = sand.u32 %s23, 1
          %s298 = scalar_lea.sflag [#allocation3], %s297
          %s299 = sand.u32 %s124, 1
          %s300 = smul.addr %s299, 8
          %s301 = scalar_lea.vmem [#allocation8], %s300
          %s303 = ssub.s32 128, 128
          %304 = vsyncadd %s298, %s303
          %s305 = sadd.s32 %s31, %s30
          %s306 = smul.addr %s305, 128
          %s307 = scalar_lea.hbm %s3, %s306
          %s309 = sshll.u32 %s301, 4
          %s310 = int_to_ptr.vmem [resolvable:$true] %s309
          %312 = dma.hbm_to_vmem [thread:$0]  %s307, 128, %s310, %s298
        $region32: #{tpu_custom_call.1} parent=19 // pred_fallthru
          _
      $region20: #{tpu_custom_call.1} parent=5 // pred_fallthru
        _
      %p313 = scmp.le.s32.totalorder 1, %s23
      %p314 = scmp.lt.s32.totalorder %s23, 3
      %p315 = pnand %p313, %p314
      %p316 = pneg %p315
      // Predicated region
      $region33: #{tpu_custom_call.1} parent=5 // pred_check
        _
      $region34: #{tpu_custom_call.1} parent=5 // pred_check_branch
        %318 = sbr.rel (%p315) target = $region36
      $region35: #{tpu_custom_call.1} parent=5 // pred_region
        %s319 = ssub.s32 %s23, 1
        %s320 = sand.u32 %s28, 1
        %s321 = scalar_lea.sflag [#allocation3], %s320
        %s322 = sand.u32 %s50, 1
        %s323 = smul.addr %s322, 4
        %s324 = scalar_lea.vmem [#allocation2], %s323
        // Predicated region
        $region37: #{tpu_custom_call.1} parent=35 // pred_check
          %p325 = pneg %p63
        $region38: #{tpu_custom_call.1} parent=35 // pred_check_branch
          %327 = sbr.rel (%p325) target = $region40
        $region39: #{tpu_custom_call.1} parent=35 // pred_region
          %328 = dma.done %s321, 64
        $region40: #{tpu_custom_call.1} parent=35 // pred_fallthru
          _
        // Predicated region
        $region41: #{tpu_custom_call.1} parent=35 // pred_check
          %p329 = pneg %p84
        $region42: #{tpu_custom_call.1} parent=35 // pred_check_branch
          %331 = sbr.rel (%p329) target = $region44
        $region43: #{tpu_custom_call.1} parent=35 // pred_region
          %332 = dma.done [#allocation6], 512
        $region44: #{tpu_custom_call.1} parent=35 // pred_fallthru
          _
        %s333 = sand.u32 %s28, 1
        %s334 = scalar_lea.sflag [#allocation3], %s333
        %s335 = sand.u32 %s99, 1
        %s336 = smul.addr %s335, 8
        %s337 = scalar_lea.vmem [#allocation7], %s336
        // Predicated region
        $region45: #{tpu_custom_call.1} parent=35 // pred_check
          %p338 = pneg %p112
        $region46: #{tpu_custom_call.1} parent=35 // pred_check_branch
          %340 = sbr.rel (%p338) target = $region48
        $region47: #{tpu_custom_call.1} parent=35 // pred_region
          %341 = dma.done %s334, 128
        $region48: #{tpu_custom_call.1} parent=35 // pred_fallthru
          _
        %s342 = sand.u32 %s28, 1
        %s343 = scalar_lea.sflag [#allocation3], %s342
        %s344 = sand.u32 %s127, 1
        %s345 = smul.addr %s344, 8
        %s346 = scalar_lea.vmem [#allocation8], %s345
        // Predicated region
        $region49: #{tpu_custom_call.1} parent=35 // pred_check
          %p347 = pneg %p140
        $region50: #{tpu_custom_call.1} parent=35 // pred_check_branch
          %349 = sbr.rel (%p347) target = $region52
        $region51: #{tpu_custom_call.1} parent=35 // pred_region
          %350 = dma.done %s343, 128
        $region52: #{tpu_custom_call.1} parent=35 // pred_fallthru
          _
        %s351 = sand.u32 %s28, 1
        %s352 = scalar_lea.sflag [#allocation3], %s351
        %s353 = sand.u32 %s50, 1
        %s354 = smul.addr %s353, 4
        %s355 = scalar_lea.vmem [#allocation2], %s354
        %p356 = pneg %p63
        %p357 = pneg %p60
        %p358 = pneg %p84
        %p359 = pneg %p81
        %s360 = sand.u32 %s28, 1
        %s361 = scalar_lea.sflag [#allocation3], %s360
        %s362 = sand.u32 %s99, 1
        %s363 = smul.addr %s362, 8
        %s364 = scalar_lea.vmem [#allocation7], %s363
        %p365 = pneg %p112
        %p366 = pneg %p109
        %s367 = sand.u32 %s28, 1
        %s368 = scalar_lea.sflag [#allocation3], %s367
        %s369 = sand.u32 %s127, 1
        %s370 = smul.addr %s369, 8
        %s371 = scalar_lea.vmem [#allocation8], %s370
        %p372 = pneg %p140
        %p373 = pneg %p137
        %p374 = pneg %p168
        %p375 = pneg %p165
        %s376 = sand.u32 %s155, 1
        %s377 = scalar_lea.sflag [#allocation4], %s376
        %s378 = sand.u32 %s155, 1
        %s379 = smul.addr %s378, 16
        %s380 = scalar_lea.vmem [#allocation9], %s379
        %p381 = pneg %p196
        %p382 = pneg %p193
        %s383 = sand.u32 %s28, 1
        %s384 = scalar_lea.sflag [#allocation11], %s383
        %s385 = sand.u32 %s183, 1
        %s386 = smul.addr %s385, 16
        %s387 = scalar_lea.vmem [#allocation10], %s386
        %p388 = pneg %p224
        %p389 = pneg %p221
        %s390 = sand.u32 %s28, 1
        %s391 = scalar_lea.sflag [#allocation11], %s390
        %s392 = sand.u32 %s211, 1
        %s393 = smul.addr %s392, 16
        %s394 = scalar_lea.vmem [#allocation12], %s393
        %v396 = vld [vmem:[%s337] sm:$0xff]
        %v397 = vld [vmem:[%s346] sm:$0xff]
        %v398 = vld [vmem:[%s324] sm:$0xf]
        %v399 = vld [vmem:[#allocation5] sm:$0xff]
        %v400 = vld [vmem:[#allocation5 + $0x8] sm:$0xff]
        %v401 = vld [vmem:[#allocation5 + $0x10] sm:$0xff]
        %v402 = vld [vmem:[#allocation5 + $0x18] sm:$0xff]
        %v407 = vunpack.c.l.b16 %v399
        %v408 = vunpack.c.h.b16 %v399
        %v409 = vunpack.c.l.b16 %v400
        %v410 = vunpack.c.h.b16 %v400
        %v411 = vunpack.c.l.b16 %v401
        %v412 = vunpack.c.h.b16 %v401
        %v413 = vunpack.c.l.b16 %v402
        %v414 = vunpack.c.h.b16 %v402
        %v415 = vpack.c.b16 %v409, %v407
        %v416 = vpack.c.b16 %v410, %v408
        %v417 = vpack.c.b16 %v413, %v411
        %v418 = vpack.c.b16 %v414, %v412
        %vm423 = vcmask 261120
        %v425 = vsel %vm423, %v398, 0
        %427 = vmatprep.subr.bf16.mxu0 %v416
        %428 = vmatpush1.bf16.msra.mxu0 %v415
        %429 = vmatprep.subr.bf16.mxu0 %v418
        %430 = vmatpush1.bf16.msra.mxu0 %v417
        %431 = vmatprep.subr.bf16.mxu0 0
        %432 = vmatpush1.bf16.msra.mxu0 0
        %433 = vmatprep.subr.bf16.mxu0 0
        %434 = vmatpush1.bf16.msra.mxu0 0
        %435 = vmatprep.subr.bf16.mxu0 0
        %436 = vmatpush1.bf16.msra.mxu0 0
        %437 = vmatprep.subr.bf16.mxu0 0
        %438 = vmatpush1.bf16.msra.mxu0 0
        %439 = vmatprep.subr.bf16.mxu0 0
        %440 = vmatpush1.bf16.msra.mxu0 0
        %441 = vmatprep.subr.bf16.mxu0 0
        %442 = vmatpush1.bf16.msra.mxu0 0
        %443 = vmatprep.subr.bf16.mxu0 0
        %444 = vmatpush1.bf16.msra.mxu0 0
        %445 = vmatprep.subr.bf16.mxu0 0
        %446 = vmatpush1.bf16.msra.mxu0 0
        %447 = vmatprep.subr.bf16.mxu0 0
        %448 = vmatpush1.bf16.msra.mxu0 0
        %449 = vmatprep.subr.bf16.mxu0 0
        %450 = vmatpush1.bf16.msra.mxu0 0
        %451 = vmatprep.subr.bf16.mxu0 0
        %452 = vmatpush1.bf16.msra.mxu0 0
        %453 = vmatprep.subr.bf16.mxu0 0
        %454 = vmatpush1.bf16.msra.mxu0 0
        %455 = vmatprep.subr.bf16.mxu0 0
        %456 = vmatpush1.bf16.msra.mxu0 0
        %457 = vmatprep.subr.bf16.mxu0 0
        %458 = vmatpush1.bf16.msra.mxu0 0
        %459 = vmatprep.mubr.bf16.mxu0 0
        %460 = vmatmul.mubr.bf16.gmra.mrb[0].mxu0 %v425
        %v461 = vpop.f32.mrb[0].mxu0
        %v462 = vadd.f32 0.0, %v461
        %v463 = vpop.f32.mrb[0].mxu0
        %v464 = vadd.f32 0.0, %v463
        %v465 = vpop.f32.mrb[0].mxu0
        %v466 = vpop.f32.mrb[0].mxu0
        %467 = vdwg.mxu0
        %469 = vrot.lane.b32.xlu0 %v462, 120
        %v470 = vpop.permute.xlu0 %469
        %472 = vrot.lane.b32.xlu0 %v462, 8
        %v473 = vpop.permute.xlu0 %472
        %vm475 = vcmask 64512
        %v476 = vsel %vm475, %v470, %v473
        %v477 = vmul.f32 %v462, %v397
        %v478 = vmul.f32 %v476, %v396
        %v479 = vadd.f32 %v477, %v478
        %v480 = vmul.f32 %v479, 0.25
        %v481 = vpack.c.bf16 %v480, %v480
        %vm482 = vcmask 125952
        %483 = vst.msk [vmem:[%s380] sm:$0xf] %vm482, %v481
        %484 = vrot.lane.b32.xlu0 %v462, 56
        %v485 = vpop.permute.xlu0 %484
        %487 = vrot.lane.b32.xlu0 %v462, 72
        %v488 = vpop.permute.xlu0 %487
        %v490 = vsel %vm475, %v485, %v488
        %492 = vrot.lane.b32.xlu0 %v397, 64
        %v493 = vpop.permute.xlu0 %492
        %v495 = vmul.f32 %v462, %v493
        %v496 = vmul.f32 %v490, %v396
        %498 = vrot.lane.b32.xlu0 %v496, 64
        %v499 = vpop.permute.xlu0 %498
        %v501 = vadd.f32 %v495, %v499
        %v502 = vpack.c.bf16 %v501, %v501
        %v504 = vunpack.c.l.b16 %v502
        %v505 = vpack.c.b16 %v504, %v504
        %506 = vrot.lane.b32.xlu0 %v505, 64
        %v507 = vpop.permute.xlu0 %506
        %509 = vst.msk [vmem:[%s387] sm:$0xf] %vm482, %v507
        %v510 = vpack.c.bf16 %v464, %v464
        %511 = vst.msk [vmem:[%s394] sm:$0xf] %vm482, %v510
        %512 = vrot.lane.b32.xlu0 %v462, 104
        %v513 = vpop.permute.xlu0 %512
        %v515 = vsel %vm475, %v513, %v470
        %516 = vrot.lane.b32.xlu0 %v397, 16
        %v517 = vpop.permute.xlu0 %516
        %v519 = vmul.f32 %v462, %v517
        %v520 = vmul.f32 %v515, %v396
        %522 = vrot.lane.b32.xlu0 %v520, 16
        %v523 = vpop.permute.xlu0 %522
        %v525 = vadd.f32 %v519, %v523
        %v526 = vmul.f32 %v525, 0.25
        %v527 = vpack.c.bf16 %v526, %v526
        %v529 = vunpack.c.l.b16 %v527
        %v530 = vpack.c.b16 %v529, %v529
        %531 = vrot.lane.b32.xlu0 %v530, 112
        %v532 = vpop.permute.xlu0 %531
        %s534 = scalar_lea.vmem %s380, 4 [#allocation9]
        %535 = vst.msk [vmem:[%s534] sm:$0xf] %vm482, %v532
        %536 = vrot.lane.b32.xlu0 %v462, 40
        %v537 = vpop.permute.xlu0 %536
        %v539 = vsel %vm475, %v537, %v485
        %540 = vrot.lane.b32.xlu0 %v397, 80
        %v541 = vpop.permute.xlu0 %540
        %v543 = vmul.f32 %v462, %v541
        %v544 = vmul.f32 %v539, %v396
        %546 = vrot.lane.b32.xlu0 %v544, 80
        %v547 = vpop.permute.xlu0 %546
        %v549 = vadd.f32 %v543, %v547
        %v550 = vpack.c.bf16 %v549, %v549
        %v552 = vunpack.c.l.b16 %v550
        %v553 = vpack.c.b16 %v552, %v552
        %554 = vrot.lane.b32.xlu0 %v553, 48
        %v555 = vpop.permute.xlu0 %554
        %s557 = scalar_lea.vmem %s387, 4 [#allocation10]
        %558 = vst.msk [vmem:[%s557] sm:$0xf] %vm482, %v555
        %v560 = vunpack.c.l.b16 %v510
        %v561 = vpack.c.b16 %v560, %v560
        %562 = vrot.lane.b32.xlu0 %v561, 112
        %v563 = vpop.permute.xlu0 %562
        %s565 = scalar_lea.vmem %s394, 4 [#allocation12]
        %566 = vst.msk [vmem:[%s565] sm:$0xf] %vm482, %v563
        %567 = vrot.lane.b32.xlu0 %v462, 88
        %v568 = vpop.permute.xlu0 %567
        %v570 = vsel %vm475, %v568, %v513
        %571 = vrot.lane.b32.xlu0 %v397, 32
        %v572 = vpop.permute.xlu0 %571
        %v574 = vmul.f32 %v462, %v572
        %v575 = vmul.f32 %v570, %v396
        %577 = vrot.lane.b32.xlu0 %v575, 32
        %v578 = vpop.permute.xlu0 %577
        %v580 = vadd.f32 %v574, %v578
        %v581 = vmul.f32 %v580, 0.25
        %v582 = vpack.c.bf16 %v581, %v581
        %v584 = vunpack.c.l.b16 %v582
        %v585 = vpack.c.b16 %v584, %v584
        %586 = vrot.lane.b32.xlu0 %v585, 96
        %v587 = vpop.permute.xlu0 %586
        %s589 = scalar_lea.vmem %s380, 8 [#allocation9]
        %590 = vst.msk [vmem:[%s589] sm:$0xf] %vm482, %v587
        %591 = vrot.lane.b32.xlu0 %v462, 24
        %v592 = vpop.permute.xlu0 %591
        %v594 = vsel %vm475, %v592, %v537
        %595 = vrot.lane.b32.xlu0 %v397, 96
        %v596 = vpop.permute.xlu0 %595
        %v598 = vmul.f32 %v462, %v596
        %v599 = vmul.f32 %v594, %v396
        %601 = vrot.lane.b32.xlu0 %v599, 96
        %v602 = vpop.permute.xlu0 %601
        %v604 = vadd.f32 %v598, %v602
        %v605 = vpack.c.bf16 %v604, %v604
        %v607 = vunpack.c.l.b16 %v605
        %v608 = vpack.c.b16 %v607, %v607
        %609 = vrot.lane.b32.xlu0 %v608, 32
        %v610 = vpop.permute.xlu0 %609
        %s612 = scalar_lea.vmem %s387, 8 [#allocation10]
        %613 = vst.msk [vmem:[%s612] sm:$0xf] %vm482, %v610
        %614 = vrot.lane.b32.xlu0 %v561, 96
        %v615 = vpop.permute.xlu0 %614
        %s617 = scalar_lea.vmem %s394, 8 [#allocation12]
        %618 = vst.msk [vmem:[%s617] sm:$0xf] %vm482, %v615
        %v619 = vsel %vm475, %v488, %v568
        %620 = vrot.lane.b32.xlu0 %v397, 48
        %v621 = vpop.permute.xlu0 %620
        %v623 = vmul.f32 %v462, %v621
        %v624 = vmul.f32 %v619, %v396
        %626 = vrot.lane.b32.xlu0 %v624, 48
        %v627 = vpop.permute.xlu0 %626
        %v629 = vadd.f32 %v623, %v627
        %v630 = vmul.f32 %v629, 0.25
        %v631 = vpack.c.bf16 %v630, %v630
        %v633 = vunpack.c.l.b16 %v631
        %v634 = vpack.c.b16 %v633, %v633
        %635 = vrot.lane.b32.xlu0 %v634, 80
        %v636 = vpop.permute.xlu0 %635
        %s638 = scalar_lea.vmem %s380, 12 [#allocation9]
        %639 = vst.msk [vmem:[%s638] sm:$0xf] %vm482, %v636
        %v640 = vsel %vm475, %v473, %v592
        %641 = vrot.lane.b32.xlu0 %v397, 112
        %v642 = vpop.permute.xlu0 %641
        %v644 = vmul.f32 %v462, %v642
        %v645 = vmul.f32 %v640, %v396
        %647 = vrot.lane.b32.xlu0 %v645, 112
        %v648 = vpop.permute.xlu0 %647
        %v650 = vadd.f32 %v644, %v648
        %v651 = vpack.c.bf16 %v650, %v650
        %v653 = vunpack.c.l.b16 %v651
        %v654 = vpack.c.b16 %v653, %v653
        %655 = vrot.lane.b32.xlu0 %v654, 16
        %v656 = vpop.permute.xlu0 %655
        %s658 = scalar_lea.vmem %s387, 12 [#allocation10]
        %659 = vst.msk [vmem:[%s658] sm:$0xf] %vm482, %v656
        %660 = vrot.lane.b32.xlu0 %v561, 80
        %v661 = vpop.permute.xlu0 %660
        %s663 = scalar_lea.vmem %s394, 12 [#allocation12]
        %664 = vst.msk [vmem:[%s663] sm:$0xf] %vm482, %v661
        %s665 = sand.u32 %s155, 1
        %s666 = scalar_lea.sflag [#allocation4], %s665
        %s667 = sand.u32 %s155, 1
        %s668 = smul.addr %s667, 16
        %s669 = scalar_lea.vmem [#allocation9], %s668
        %s670 = sand.u32 %s28, 1
        %s671 = scalar_lea.sflag [#allocation11], %s670
        %s672 = sand.u32 %s183, 1
        %s673 = smul.addr %s672, 16
        %s674 = scalar_lea.vmem [#allocation10], %s673
        %s675 = sand.u32 %s28, 1
        %s676 = scalar_lea.sflag [#allocation11], %s675
        %s677 = sand.u32 %s211, 1
        %s678 = smul.addr %s677, 16
        %s679 = scalar_lea.vmem [#allocation12], %s678
        // Predicated region
        $region53: #{tpu_custom_call.1} parent=35 // pred_check
          %p680 = pneg %p165
        $region54: #{tpu_custom_call.1} parent=35 // pred_check_branch
          %682 = sbr.rel (%p680) target = $region56
        $region55: #{tpu_custom_call.1} parent=35 // pred_region
          %s684 = ssub.s32 256, 256
          %685 = vsyncadd %s666, %s684
          %s686 = smul.addr %s32, 4
          %s687 = sadd.s32 %s33, %s686
          %s688 = smul.addr %s687, 64
          %s689 = scalar_lea.hbm %s4, %s688
          %s690 = sshll.u32 %s669, 4
          %s691 = int_to_ptr.vmem [resolvable:$true] %s690
          %696 = dma.vmem_to_hbm [thread:$0]  %s691, 256, %s689, %s666, 64, 64, 4
        $region56: #{tpu_custom_call.1} parent=35 // pred_fallthru
          _
        // Predicated region
        $region57: #{tpu_custom_call.1} parent=35 // pred_check
          %p697 = pneg %p193
        $region58: #{tpu_custom_call.1} parent=35 // pred_check_branch
          %699 = sbr.rel (%p697) target = $region60
        $region59: #{tpu_custom_call.1} parent=35 // pred_region
          %s701 = ssub.s32 256, 256
          %702 = vsyncadd %s671, %s701
          %s703 = smul.addr %s32, 4
          %s704 = sadd.s32 %s33, %s703
          %s705 = smul.addr %s704, 64
          %s706 = scalar_lea.hbm %s5, %s705
          %s707 = sshll.u32 %s674, 4
          %s708 = int_to_ptr.vmem [resolvable:$true] %s707
          %713 = dma.vmem_to_hbm [thread:$0]  %s708, 256, %s706, %s671, 64, 64, 4
        $region60: #{tpu_custom_call.1} parent=35 // pred_fallthru
          _
        // Predicated region
        $region61: #{tpu_custom_call.1} parent=35 // pred_check
          %p714 = pneg %p221
        $region62: #{tpu_custom_call.1} parent=35 // pred_check_branch
          %716 = sbr.rel (%p714) target = $region64
        $region63: #{tpu_custom_call.1} parent=35 // pred_region
          %s718 = ssub.s32 256, 256
          %719 = vsyncadd %s676, %s718
          %s720 = smul.addr %s32, 4
          %s721 = sadd.s32 %s33, %s720
          %s722 = smul.addr %s721, 64
          %s723 = scalar_lea.hbm %s6, %s722
          %s724 = sshll.u32 %s679, 4
          %s725 = int_to_ptr.vmem [resolvable:$true] %s724
          %730 = dma.vmem_to_hbm [thread:$0]  %s725, 256, %s723, %s676, 64, 64, 4
        $region64: #{tpu_custom_call.1} parent=35 // pred_fallthru
          _
      $region36: #{tpu_custom_call.1} parent=5 // pred_fallthru
        _
      %p731 = scmp.le.s32.totalorder 2, %s23
      // Predicated region
      $region65: #{tpu_custom_call.1} parent=5 // pred_check
        %p732 = pneg %p731
      $region66: #{tpu_custom_call.1} parent=5 // pred_check_branch
        %734 = sbr.rel (%p732) target = $region68
      $region67: #{tpu_custom_call.1} parent=5 // pred_region
        %s735 = ssub.s32 %s23, 2
        // Predicated region
        $region69: #{tpu_custom_call.1} parent=67 // pred_check
          %p736 = pneg %p171
        $region70: #{tpu_custom_call.1} parent=67 // pred_check_branch
          %738 = sbr.rel (%p736) target = $region72
        $region71: #{tpu_custom_call.1} parent=67 // pred_region
          %s739 = sand.u32 %s156, 1
          %s740 = scalar_lea.sflag [#allocation4], %s739
          %s741 = sand.u32 %s156, 1
          %s742 = smul.addr %s741, 16
          %s743 = scalar_lea.vmem [#allocation9], %s742
          %744 = dma.done %s740, 256
        $region72: #{tpu_custom_call.1} parent=67 // pred_fallthru
          _
        // Predicated region
        $region73: #{tpu_custom_call.1} parent=67 // pred_check
          %p745 = pneg %p199
        $region74: #{tpu_custom_call.1} parent=67 // pred_check_branch
          %747 = sbr.rel (%p745) target = $region76
        $region75: #{tpu_custom_call.1} parent=67 // pred_region
          %s748 = sand.u32 %s29, 1
          %s749 = scalar_lea.sflag [#allocation11], %s748
          %s750 = sand.u32 %s184, 1
          %s751 = smul.addr %s750, 16
          %s752 = scalar_lea.vmem [#allocation10], %s751
          %753 = dma.done %s749, 256
        $region76: #{tpu_custom_call.1} parent=67 // pred_fallthru
          _
        // Predicated region
        $region77: #{tpu_custom_call.1} parent=67 // pred_check
          %p754 = pneg %p227
        $region78: #{tpu_custom_call.1} parent=67 // pred_check_branch
          %756 = sbr.rel (%p754) target = $region80
        $region79: #{tpu_custom_call.1} parent=67 // pred_region
          %s757 = sand.u32 %s29, 1
          %s758 = scalar_lea.sflag [#allocation11], %s757
          %s759 = sand.u32 %s212, 1
          %s760 = smul.addr %s759, 16
          %s761 = scalar_lea.vmem [#allocation12], %s760
          %762 = dma.done %s758, 256
        $region80: #{tpu_custom_call.1} parent=67 // pred_fallthru
          _
      $region68: #{tpu_custom_call.1} parent=5 // pred_fallthru
        _
    $region6: #{tpu_custom_call.1} parent=1 // loop_footer
      %s27 = sadd.s32 1, %s23
    $region7: #{tpu_custom_call.1} parent=1 // loop_footer_branch
      %22 = sbr.rel target = $region3
    $region8: #{tpu_custom_call.1} parent=1 // loop_exit
      _
    %763 = vsyncpa [#allocation3], 1
    %s764 = scalar_lea.sflag [#allocation3], 1
    %765 = vsyncpa %s764, 1
    %766 = vsyncpa [#allocation6], 1
    %767 = vsyncpa [#allocation4], 1
    %s768 = scalar_lea.sflag [#allocation4], 1
    %769 = vsyncpa %s768, 1
    %770 = vsyncpa [#allocation11], 1
    %s771 = scalar_lea.sflag [#allocation11], 1
    %772 = vsyncpa %s771, 1

// kernel: tpu_custom_call.1
$region0: #{tpu_custom_call.1}
  #allocation0 [shape = 'u32[]', space=smem, size = 0x4, offset = 0x4, fixed_abs, tag = 'smem constant byte address 0x4 - core index']
  #allocation1 [shape = 'u32[144,128]{1,0:T(1,128)}', space=vmem, size = 0x12000, scoped, tag = 'internal scratch']
  %s0 = inlined_call_operand.hbm [shape: bf16[2,8,32], index: 0, kind: input, shape index: {}]
  %s1 = inlined_call_operand.hbm [shape: bf16[32,192], index: 1, kind: input, shape index: {}]
  %s2 = inlined_call_operand.hbm [shape: f32[2,8,16], index: 2, kind: input, shape index: {}]
  %s3 = inlined_call_operand.hbm [shape: f32[2,8,16], index: 3, kind: input, shape index: {}]
  %s4 = inlined_call_operand.hbm [shape: bf16[2,4,8,16], index: 4, kind: output, shape index: {0}]
  %s5 = inlined_call_operand.hbm [shape: bf16[2,4,8,16], index: 5, kind: output, shape index: {1}]
  %s6 = inlined_call_operand.hbm [shape: bf16[2,4,8,16], index: 6, kind: output, shape index: {2}]
  %7 = xla_tuple %s4, %s5, %s6
  %s8 = sld [smem:[#allocation0]]
  $region81: #{tpu_custom_call.1} parent=0
    _
  %s10 = ssub.s32 1, %s8
  %s11 = scalar_select 0, %s10, %s8
  $region1: #{tpu_custom_call.1} parent=0
    #allocation2 [shape = 'u8[4096]{0}', space=vmem, size = 0x1000, scoped, tag = 'input window, operand 0']
    #allocation3 [shape = 's32[2]{0}', space=sflag, size = 0x8, scoped, tag = 'scoped memory for tpu_custom_call.1']
    #allocation4 [shape = 's32[2]{0}', space=sflag, size = 0x8, scoped, tag = 'scoped memory for tpu_custom_call.1']
    #allocation5 [shape = 'u8[16384]{0}', space=vmem, size = 0x4000, scoped, tag = 'input window, operand 1, single buffered']
    #allocation6 [shape = 's32[1]{0}', space=sflag, size = 0x4, scoped, tag = 'scoped memory for tpu_custom_call.1']
    #allocation7 [shape = 'u8[8192]{0}', space=vmem, size = 0x2000, scoped, tag = 'input window, operand 2']
    #allocation8 [shape = 'u8[8192]{0}', space=vmem, size = 0x2000, scoped, tag = 'input window, operand 3']
    #allocation9 [shape = 'u8[16384]{0}', space=vmem, size = 0x4000, scoped, tag = 'output window, operand 0']
    #allocation10 [shape = 'u8[16384]{0}', space=vmem, size = 0x4000, scoped, tag = 'output window, operand 1']
    #allocation11 [shape = 's32[2]{0}', space=sflag, size = 0x8, scoped, tag = 'scoped memory for tpu_custom_call.1']
    #allocation12 [shape = 'u8[16384]{0}', space=vmem, size = 0x4000, scoped, tag = 'output window, operand 2']
    %12 = vsyncpa [#allocation3], 0
    %s13 = scalar_lea.sflag [#allocation3], 1
    %14 = vsyncpa %s13, 0
    %15 = vsyncpa [#allocation6], 0
    %16 = vsyncpa [#allocation4], 0
    %s17 = scalar_lea.sflag [#allocation4], 1
    %18 = vsyncpa %s17, 0
    %19 = vsyncpa [#allocation11], 0
    %s20 = scalar_lea.sflag [#allocation11], 1
    %21 = vsyncpa %s20, 0
    loop: start=0, step=1, limit=4
    $region2: #{tpu_custom_call.1} parent=1 // loop_pre_header
      _
    $region3: #{tpu_custom_call.1} parent=1 // loop_header
      %s23 = sphi 0, %s27
      %p24 = scmp.ge.s32.totalorder %s23, 4
      %s30 = sphi 0, %s42
      %s31 = sphi 0, %s38
      %s32 = sphi 0, %s30
      %s33 = sphi 0, %s31
      %s34 = sphi 0, %s32
      %s35 = sphi 0, %s33
      %s47 = sphi 0, %s49
      %s50 = sphi 0, %s47
      %s51 = sphi 0, %s50
      %s67 = sphi 0, %s51
      %s71 = sphi 0, %s71
      %s73 = sphi 0, %s71
      %s74 = sphi 0, %s73
      %s88 = sphi 0, %s74
      %s96 = sphi 0, %s98
      %s99 = sphi 0, %s96
      %s100 = sphi 0, %s99
      %s116 = sphi 0, %s100
      %s124 = sphi 0, %s126
      %s127 = sphi 0, %s124
      %s128 = sphi 0, %s127
      %s144 = sphi 0, %s128
      %s152 = sphi 0, %s154
      %s155 = sphi 0, %s152
      %s156 = sphi 0, %s155
      %s172 = sphi 0, %s156
      %s180 = sphi 0, %s182
      %s183 = sphi 0, %s180
      %s184 = sphi 0, %s183
      %s200 = sphi 0, %s184
      %s208 = sphi 0, %s210
      %s211 = sphi 0, %s208
      %s212 = sphi 0, %s211
      %s228 = sphi 0, %s212
    $region4: #{tpu_custom_call.1} parent=1 // loop_header_branch
      %26 = sbr.rel (%p24) target = $region8
    $region5: #{tpu_custom_call.1} parent=1 // loop_body
      %s28 = ssub.s32 %s23, 1
      %s29 = ssub.s32 %s23, 2
      %s36 = sadd.s32 1, %s31
      %p37 = scmp.ge.s32.totalorder %s36, 1
      %s38 = scalar_select %p37, 0, %s36
      %s39 = sadd.s32 1, %s30
      %s40 = scalar_select %p37, %s39, %s30
      %p41 = scmp.ge.s32.totalorder %s40, 2
      %s42 = scalar_select %p41, 0, %s40
      %s43 = ssub.s32 %s30, %s42
      %s44 = ssub.s32 %s31, %s38
      %s45 = sor.u32 %s43, %s44
      %p46 = scmp.eq.s32.totalorder %s45, 0
      %s48 = sadd.s32 %s47, 1
      %s49 = scalar_select %p46, %s47, %s48
      %p52 = pneg %p46
      %p53 = scmp.eq.s32.totalorder %s23, 1
      %p54 = por %p52, %p53
      %p55 = scmp.ne.s32.totalorder %s47, %s50
      %p56 = scmp.eq.s32.totalorder %s23, 0
      %p57 = por %p55, %p56
      %p58 = scmp.ne.s32.totalorder %s47, %s50
      %p59 = scmp.eq.s32.totalorder %s28, 1
      %p60 = por %p58, %p59
      %p61 = scmp.ne.s32.totalorder %s50, %s51
      %p62 = scmp.eq.s32.totalorder %s28, 0
      %p63 = por %p61, %p62
      %p64 = scmp.ne.s32.totalorder %s50, %s51
      %p65 = scmp.eq.s32.totalorder %s29, 1
      %p66 = por %p64, %p65
      %p68 = scmp.ne.s32.totalorder %s51, %s67
      %p69 = scmp.eq.s32.totalorder %s29, 0
      %p70 = por %p68, %p69
      %s72 = sadd.s32 %s71, 1
      %p75 = scmp.eq.s32.totalorder %s23, 1
      %p76 = scmp.ne.s32.totalorder %s71, %s73
      %p77 = scmp.eq.s32.totalorder %s23, 0
      %p78 = por %p76, %p77
      %p79 = scmp.ne.s32.totalorder %s71, %s73
      %p80 = scmp.eq.s32.totalorder %s28, 1
      %p81 = por %p79, %p80
      %p82 = scmp.ne.s32.totalorder %s73, %s74
      %p83 = scmp.eq.s32.totalorder %s28, 0
      %p84 = por %p82, %p83
      %p85 = scmp.ne.s32.totalorder %s73, %s74
      %p86 = scmp.eq.s32.totalorder %s29, 1
      %p87 = por %p85, %p86
      %p89 = scmp.ne.s32.totalorder %s74, %s88
      %p90 = scmp.eq.s32.totalorder %s29, 0
      %p91 = por %p89, %p90
      %s92 = ssub.s32 %s30, %s42
      %s93 = ssub.s32 %s31, %s38
      %s94 = sor.u32 %s92, %s93
      %p95 = scmp.eq.s32.totalorder %s94, 0
      %s97 = sadd.s32 %s96, 1
      %s98 = scalar_select %p95, %s96, %s97
      %p101 = pneg %p95
      %p102 = scmp.eq.s32.totalorder %s23, 1
      %p103 = por %p101, %p102
      %p104 = scmp.ne.s32.totalorder %s96, %s99
      %p105 = scmp.eq.s32.totalorder %s23, 0
      %p106 = por %p104, %p105
      %p107 = scmp.ne.s32.totalorder %s96, %s99
      %p108 = scmp.eq.s32.totalorder %s28, 1
      %p109 = por %p107, %p108
      %p110 = scmp.ne.s32.totalorder %s99, %s100
      %p111 = scmp.eq.s32.totalorder %s28, 0
      %p112 = por %p110, %p111
      %p113 = scmp.ne.s32.totalorder %s99, %s100
      %p114 = scmp.eq.s32.totalorder %s29, 1
      %p115 = por %p113, %p114
      %p117 = scmp.ne.s32.totalorder %s100, %s116
      %p118 = scmp.eq.s32.totalorder %s29, 0
      %p119 = por %p117, %p118
      %s120 = ssub.s32 %s30, %s42
      %s121 = ssub.s32 %s31, %s38
      %s122 = sor.u32 %s120, %s121
      %p123 = scmp.eq.s32.totalorder %s122, 0
      %s125 = sadd.s32 %s124, 1
      %s126 = scalar_select %p123, %s124, %s125
      %p129 = pneg %p123
      %p130 = scmp.eq.s32.totalorder %s23, 1
      %p131 = por %p129, %p130
      %p132 = scmp.ne.s32.totalorder %s124, %s127
      %p133 = scmp.eq.s32.totalorder %s23, 0
      %p134 = por %p132, %p133
      %p135 = scmp.ne.s32.totalorder %s124, %s127
      %p136 = scmp.eq.s32.totalorder %s28, 1
      %p137 = por %p135, %p136
      %p138 = scmp.ne.s32.totalorder %s127, %s128
      %p139 = scmp.eq.s32.totalorder %s28, 0
      %p140 = por %p138, %p139
      %p141 = scmp.ne.s32.totalorder %s127, %s128
      %p142 = scmp.eq.s32.totalorder %s29, 1
      %p143 = por %p141, %p142
      %p145 = scmp.ne.s32.totalorder %s128, %s144
      %p146 = scmp.eq.s32.totalorder %s29, 0
      %p147 = por %p145, %p146
      %s148 = ssub.s32 %s30, %s42
      %s149 = ssub.s32 %s31, %s38
      %s150 = sor.u32 %s148, %s149
      %p151 = scmp.eq.s32.totalorder %s150, 0
      %s153 = sadd.s32 %s152, 1
      %s154 = scalar_select %p151, %s152, %s153
      %p157 = pneg %p151
      %p158 = scmp.eq.s32.totalorder %s23, 1
      %p159 = por %p157, %p158
      %p160 = scmp.ne.s32.totalorder %s152, %s155
      %p161 = scmp.eq.s32.totalorder %s23, 0
      %p162 = por %p160, %p161
      %p163 = scmp.ne.s32.totalorder %s152, %s155
      %p164 = scmp.eq.s32.totalorder %s28, 1
      %p165 = por %p163, %p164
      %p166 = scmp.ne.s32.totalorder %s155, %s156
      %p167 = scmp.eq.s32.totalorder %s28, 0
      %p168 = por %p166, %p167
      %p169 = scmp.ne.s32.totalorder %s155, %s156
      %p170 = scmp.eq.s32.totalorder %s29, 1
      %p171 = por %p169, %p170
      %p173 = scmp.ne.s32.totalorder %s156, %s172
      %p174 = scmp.eq.s32.totalorder %s29, 0
      %p175 = por %p173, %p174
      %s176 = ssub.s32 %s30, %s42
      %s177 = ssub.s32 %s31, %s38
      %s178 = sor.u32 %s176, %s177
      %p179 = scmp.eq.s32.totalorder %s178, 0
      %s181 = sadd.s32 %s180, 1
      %s182 = scalar_select %p179, %s180, %s181
      %p185 = pneg %p179
      %p186 = scmp.eq.s32.totalorder %s23, 1
      %p187 = por %p185, %p186
      %p188 = scmp.ne.s32.totalorder %s180, %s183
      %p189 = scmp.eq.s32.totalorder %s23, 0
      %p190 = por %p188, %p189
      %p191 = scmp.ne.s32.totalorder %s180, %s183
      %p192 = scmp.eq.s32.totalorder %s28, 1
      %p193 = por %p191, %p192
      %p194 = scmp.ne.s32.totalorder %s183, %s184
      %p195 = scmp.eq.s32.totalorder %s28, 0
      %p196 = por %p194, %p195
      %p197 = scmp.ne.s32.totalorder %s183, %s184
      %p198 = scmp.eq.s32.totalorder %s29, 1
      %p199 = por %p197, %p198
      %p201 = scmp.ne.s32.totalorder %s184, %s200
      %p202 = scmp.eq.s32.totalorder %s29, 0
      %p203 = por %p201, %p202
      %s204 = ssub.s32 %s30, %s42
      %s205 = ssub.s32 %s31, %s38
      %s206 = sor.u32 %s204, %s205
      %p207 = scmp.eq.s32.totalorder %s206, 0
      %s209 = sadd.s32 %s208, 1
      %s210 = scalar_select %p207, %s208, %s209
      %p213 = pneg %p207
      %p214 = scmp.eq.s32.totalorder %s23, 1
      %p215 = por %p213, %p214
      %p216 = scmp.ne.s32.totalorder %s208, %s211
      %p217 = scmp.eq.s32.totalorder %s23, 0
      %p218 = por %p216, %p217
      %p219 = scmp.ne.s32.totalorder %s208, %s211
      %p220 = scmp.eq.s32.totalorder %s28, 1
      %p221 = por %p219, %p220
      %p222 = scmp.ne.s32.totalorder %s211, %s212
      %p223 = scmp.eq.s32.totalorder %s28, 0
      %p224 = por %p222, %p223
      %p225 = scmp.ne.s32.totalorder %s211, %s212
      %p226 = scmp.eq.s32.totalorder %s29, 1
      %p227 = por %p225, %p226
      %p229 = scmp.ne.s32.totalorder %s212, %s228
      %p230 = scmp.eq.s32.totalorder %s29, 0
      %p231 = por %p229, %p230
      %p232 = scmp.le.s32.totalorder 1, %s23
      %p233 = scmp.lt.s32.totalorder %s23, 3
      %p234 = pnand %p232, %p233
      %p235 = pneg %p234
      // Predicated region
      $region9: #{tpu_custom_call.1} parent=5 // pred_check
        _
      $region10: #{tpu_custom_call.1} parent=5 // pred_check_branch
        %237 = sbr.rel (%p234) target = $region12
      $region11: #{tpu_custom_call.1} parent=5 // pred_region
        %s238 = ssub.s32 %s23, 1
        // Predicated region
        $region13: #{tpu_custom_call.1} parent=11 // pred_check
          %p239 = pneg %p84
        $region14: #{tpu_custom_call.1} parent=11 // pred_check_branch
          %241 = sbr.rel (%p239) target = $region16
        $region15: #{tpu_custom_call.1} parent=11 // pred_region
          %s243 = ssub.s32 512, 512
          %244 = vsyncadd [#allocation6], %s243
          %s245 = sshll.u32 [#allocation5], 4
          %s246 = int_to_ptr.vmem [resolvable:$true] %s245
          %251 = dma.hbm_to_vmem [thread:$0]  %s1, 512, %s246, [#allocation6], 128, 128, 8
        $region16: #{tpu_custom_call.1} parent=11 // pred_fallthru
          _
      $region12: #{tpu_custom_call.1} parent=5 // pred_fallthru
        _
      %p252 = scmp.lt.s32.totalorder %s23, 2
      // Predicated region
      $region17: #{tpu_custom_call.1} parent=5 // pred_check
        %p253 = pneg %p252
      $region18: #{tpu_custom_call.1} parent=5 // pred_check_branch
        %255 = sbr.rel (%p253) target = $region20
      $region19: #{tpu_custom_call.1} parent=5 // pred_region
        // Predicated region
        $region21: #{tpu_custom_call.1} parent=19 // pred_check
          %p256 = pneg %p57
        $region22: #{tpu_custom_call.1} parent=19 // pred_check_branch
          %258 = sbr.rel (%p256) target = $region24
        $region23: #{tpu_custom_call.1} parent=19 // pred_region
          %s259 = sand.u32 %s23, 1
          %s260 = scalar_lea.sflag [#allocation3], %s259
          %s261 = sand.u32 %s47, 1
          %s262 = smul.addr %s261, 4
          %s263 = scalar_lea.vmem [#allocation2], %s262
          %s265 = ssub.s32 64, 64
          %266 = vsyncadd %s260, %s265
          %s267 = sadd.s32 %s31, %s30
          %s268 = smul.addr %s267, 64
          %s269 = scalar_lea.hbm %s0, %s268
          %s271 = sshll.u32 %s263, 4
          %s272 = int_to_ptr.vmem [resolvable:$true] %s271
          %274 = dma.hbm_to_vmem [thread:$0]  %s269, 64, %s272, %s260
        $region24: #{tpu_custom_call.1} parent=19 // pred_fallthru
          _
        // Predicated region
        $region25: #{tpu_custom_call.1} parent=19 // pred_check
          %p275 = pneg %p106
        $region26: #{tpu_custom_call.1} parent=19 // pred_check_branch
          %277 = sbr.rel (%p275) target = $region28
        $region27: #{tpu_custom_call.1} parent=19 // pred_region
          %s278 = sand.u32 %s23, 1
          %s279 = scalar_lea.sflag [#allocation3], %s278
          %s280 = sand.u32 %s96, 1
          %s281 = smul.addr %s280, 8
          %s282 = scalar_lea.vmem [#allocation7], %s281
          %s284 = ssub.s32 128, 128
          %285 = vsyncadd %s279, %s284
          %s286 = sadd.s32 %s31, %s30
          %s287 = smul.addr %s286, 128
          %s288 = scalar_lea.hbm %s2, %s287
          %s290 = sshll.u32 %s282, 4
          %s291 = int_to_ptr.vmem [resolvable:$true] %s290
          %293 = dma.hbm_to_vmem [thread:$0]  %s288, 128, %s291, %s279
        $region28: #{tpu_custom_call.1} parent=19 // pred_fallthru
          _
        // Predicated region
        $region29: #{tpu_custom_call.1} parent=19 // pred_check
          %p294 = pneg %p134
        $region30: #{tpu_custom_call.1} parent=19 // pred_check_branch
          %296 = sbr.rel (%p294) target = $region32
        $region31: #{tpu_custom_call.1} parent=19 // pred_region
          %s297 = sand.u32 %s23, 1
          %s298 = scalar_lea.sflag [#allocation3], %s297
          %s299 = sand.u32 %s124, 1
          %s300 = smul.addr %s299, 8
          %s301 = scalar_lea.vmem [#allocation8], %s300
          %s303 = ssub.s32 128, 128
          %304 = vsyncadd %s298, %s303
          %s305 = sadd.s32 %s31, %s30
          %s306 = smul.addr %s305, 128
          %s307 = scalar_lea.hbm %s3, %s306
          %s309 = sshll.u32 %s301, 4
          %s310 = int_to_ptr.vmem [resolvable:$true] %s309
          %312 = dma.hbm_to_vmem [thread:$0]  %s307, 128, %s310, %s298
        $region32: #{tpu_custom_call.1} parent=19 // pred_fallthru
          _
      $region20: #{tpu_custom_call.1} parent=5 // pred_fallthru
        _
      %p313 = scmp.le.s32.totalorder 1, %s23
      %p314 = scmp.lt.s32.totalorder %s23, 3
      %p315 = pnand %p313, %p314
      %p316 = pneg %p315
      // Predicated region
      $region33: #{tpu_custom_call.1} parent=5 // pred_check
        _
      $region34: #{tpu_custom_call.1} parent=5 // pred_check_branch
        %318 = sbr.rel (%p315) target = $region36
      $region35: #{tpu_custom_call.1} parent=5 // pred_region
        %s319 = ssub.s32 %s23, 1
        %s320 = sand.u32 %s28, 1
        %s321 = scalar_lea.sflag [#allocation3], %s320
        %s322 = sand.u32 %s50, 1
        %s323 = smul.addr %s322, 4
        %s324 = scalar_lea.vmem [#allocation2], %s323
        // Predicated region
        $region37: #{tpu_custom_call.1} parent=35 // pred_check
          %p325 = pneg %p63
        $region38: #{tpu_custom_call.1} parent=35 // pred_check_branch
          %327 = sbr.rel (%p325) target = $region40
        $region39: #{tpu_custom_call.1} parent=35 // pred_region
          %328 = dma.done %s321, 64
        $region40: #{tpu_custom_call.1} parent=35 // pred_fallthru
          _
        // Predicated region
        $region41: #{tpu_custom_call.1} parent=35 // pred_check
          %p329 = pneg %p84
        $region42: #{tpu_custom_call.1} parent=35 // pred_check_branch
          %331 = sbr.rel (%p329) target = $region44
        $region43: #{tpu_custom_call.1} parent=35 // pred_region
          %332 = dma.done [#allocation6], 512
        $region44: #{tpu_custom_call.1} parent=35 // pred_fallthru
          _
        %s333 = sand.u32 %s28, 1
        %s334 = scalar_lea.sflag [#allocation3], %s333
        %s335 = sand.u32 %s99, 1
        %s336 = smul.addr %s335, 8
        %s337 = scalar_lea.vmem [#allocation7], %s336
        // Predicated region
        $region45: #{tpu_custom_call.1} parent=35 // pred_check
          %p338 = pneg %p112
        $region46: #{tpu_custom_call.1} parent=35 // pred_check_branch
          %340 = sbr.rel (%p338) target = $region48
        $region47: #{tpu_custom_call.1} parent=35 // pred_region
          %341 = dma.done %s334, 128
        $region48: #{tpu_custom_call.1} parent=35 // pred_fallthru
          _
        %s342 = sand.u32 %s28, 1
        %s343 = scalar_lea.sflag [#allocation3], %s342
        %s344 = sand.u32 %s127, 1
        %s345 = smul.addr %s344, 8
        %s346 = scalar_lea.vmem [#allocation8], %s345
        // Predicated region
        $region49: #{tpu_custom_call.1} parent=35 // pred_check
          %p347 = pneg %p140
        $region50: #{tpu_custom_call.1} parent=35 // pred_check_branch
          %349 = sbr.rel (%p347) target = $region52
        $region51: #{tpu_custom_call.1} parent=35 // pred_region
          %350 = dma.done %s343, 128
        $region52: #{tpu_custom_call.1} parent=35 // pred_fallthru
          _
        %s351 = sand.u32 %s28, 1
        %s352 = scalar_lea.sflag [#allocation3], %s351
        %s353 = sand.u32 %s50, 1
        %s354 = smul.addr %s353, 4
        %s355 = scalar_lea.vmem [#allocation2], %s354
        %p356 = pneg %p63
        %p357 = pneg %p60
        %p358 = pneg %p84
        %p359 = pneg %p81
        %s360 = sand.u32 %s28, 1
        %s361 = scalar_lea.sflag [#allocation3], %s360
        %s362 = sand.u32 %s99, 1
        %s363 = smul.addr %s362, 8
        %s364 = scalar_lea.vmem [#allocation7], %s363
        %p365 = pneg %p112
        %p366 = pneg %p109
        %s367 = sand.u32 %s28, 1
        %s368 = scalar_lea.sflag [#allocation3], %s367
        %s369 = sand.u32 %s127, 1
        %s370 = smul.addr %s369, 8
        %s371 = scalar_lea.vmem [#allocation8], %s370
        %p372 = pneg %p140
        %p373 = pneg %p137
        %p374 = pneg %p168
        %p375 = pneg %p165
        %s376 = sand.u32 %s155, 1
        %s377 = scalar_lea.sflag [#allocation4], %s376
        %s378 = sand.u32 %s155, 1
        %s379 = smul.addr %s378, 16
        %s380 = scalar_lea.vmem [#allocation9], %s379
        %p381 = pneg %p196
        %p382 = pneg %p193
        %s383 = sand.u32 %s28, 1
        %s384 = scalar_lea.sflag [#allocation11], %s383
        %s385 = sand.u32 %s183, 1
        %s386 = smul.addr %s385, 16
        %s387 = scalar_lea.vmem [#allocation10], %s386
        %p388 = pneg %p224
        %p389 = pneg %p221
        %s390 = sand.u32 %s28, 1
        %s391 = scalar_lea.sflag [#allocation11], %s390
        %s392 = sand.u32 %s211, 1
        %s393 = smul.addr %s392, 16
        %s394 = scalar_lea.vmem [#allocation12], %s393
        %v396 = vld [vmem:[%s337] sm:$0xff]
        %v397 = vld [vmem:[%s346] sm:$0xff]
        %v398 = vld [vmem:[%s324] sm:$0xf]
        %v399 = vld [vmem:[#allocation5] sm:$0xff]
        %v400 = vld [vmem:[#allocation5 + $0x8] sm:$0xff]
        %v401 = vld [vmem:[#allocation5 + $0x10] sm:$0xff]
        %v402 = vld [vmem:[#allocation5 + $0x18] sm:$0xff]
        %v407 = vunpack.c.l.b16 %v399
        %v408 = vunpack.c.h.b16 %v399
        %v409 = vunpack.c.l.b16 %v400
        %v410 = vunpack.c.h.b16 %v400
        %v411 = vunpack.c.l.b16 %v401
        %v412 = vunpack.c.h.b16 %v401
        %v413 = vunpack.c.l.b16 %v402
        %v414 = vunpack.c.h.b16 %v402
        %v415 = vpack.c.b16 %v409, %v407
        %v416 = vpack.c.b16 %v410, %v408
        %v417 = vpack.c.b16 %v413, %v411
        %v418 = vpack.c.b16 %v414, %v412
        %vm423 = vcmask 261120
        %v425 = vsel %vm423, %v398, 0
        %427 = vmatprep.subr.bf16.mxu0 %v416
        %428 = vmatpush1.bf16.msra.mxu0 %v415
        %429 = vmatprep.subr.bf16.mxu0 %v418
        %430 = vmatpush1.bf16.msra.mxu0 %v417
        %431 = vmatprep.subr.bf16.mxu0 0
        %432 = vmatpush1.bf16.msra.mxu0 0
        %433 = vmatprep.subr.bf16.mxu0 0
        %434 = vmatpush1.bf16.msra.mxu0 0
        %435 = vmatprep.subr.bf16.mxu0 0
        %436 = vmatpush1.bf16.msra.mxu0 0
        %437 = vmatprep.subr.bf16.mxu0 0
        %438 = vmatpush1.bf16.msra.mxu0 0
        %439 = vmatprep.subr.bf16.mxu0 0
        %440 = vmatpush1.bf16.msra.mxu0 0
        %441 = vmatprep.subr.bf16.mxu0 0
        %442 = vmatpush1.bf16.msra.mxu0 0
        %443 = vmatprep.subr.bf16.mxu0 0
        %444 = vmatpush1.bf16.msra.mxu0 0
        %445 = vmatprep.subr.bf16.mxu0 0
        %446 = vmatpush1.bf16.msra.mxu0 0
        %447 = vmatprep.subr.bf16.mxu0 0
        %448 = vmatpush1.bf16.msra.mxu0 0
        %449 = vmatprep.subr.bf16.mxu0 0
        %450 = vmatpush1.bf16.msra.mxu0 0
        %451 = vmatprep.subr.bf16.mxu0 0
        %452 = vmatpush1.bf16.msra.mxu0 0
        %453 = vmatprep.subr.bf16.mxu0 0
        %454 = vmatpush1.bf16.msra.mxu0 0
        %455 = vmatprep.subr.bf16.mxu0 0
        %456 = vmatpush1.bf16.msra.mxu0 0
        %457 = vmatprep.subr.bf16.mxu0 0
        %458 = vmatpush1.bf16.msra.mxu0 0
        %459 = vmatprep.mubr.bf16.mxu0 0
        %460 = vmatmul.mubr.bf16.gmra.mrb[0].mxu0 %v425
        %v461 = vpop.f32.mrb[0].mxu0
        %v462 = vadd.f32 0.0, %v461
        %v463 = vpop.f32.mrb[0].mxu0
        %v464 = vadd.f32 0.0, %v463
        %v465 = vpop.f32.mrb[0].mxu0
        %v466 = vpop.f32.mrb[0].mxu0
        %467 = vdwg.mxu0
        %469 = vrot.lane.b32.xlu0 %v462, 120
        %v470 = vpop.permute.xlu0 %469
        %472 = vrot.lane.b32.xlu0 %v462, 8
        %v473 = vpop.permute.xlu0 %472
        %vm475 = vcmask 64512
        %v476 = vsel %vm475, %v470, %v473
        %v477 = vmul.f32 %v462, %v397
        %v478 = vmul.f32 %v476, %v396
        %v479 = vadd.f32 %v477, %v478
        %v480 = vmul.f32 %v479, 0.25
        %v481 = vpack.c.bf16 %v480, %v480
        %vm482 = vcmask 125952
        %483 = vst.msk [vmem:[%s380] sm:$0xf] %vm482, %v481
        %484 = vrot.lane.b32.xlu0 %v462, 56
        %v485 = vpop.permute.xlu0 %484
        %487 = vrot.lane.b32.xlu0 %v462, 72
        %v488 = vpop.permute.xlu0 %487
        %v490 = vsel %vm475, %v485, %v488
        %492 = vrot.lane.b32.xlu0 %v397, 64
        %v493 = vpop.permute.xlu0 %492
        %v495 = vmul.f32 %v462, %v493
        %v496 = vmul.f32 %v490, %v396
        %498 = vrot.lane.b32.xlu0 %v496, 64
        %v499 = vpop.permute.xlu0 %498
        %v501 = vadd.f32 %v495, %v499
        %v502 = vpack.c.bf16 %v501, %v501
        %v504 = vunpack.c.l.b16 %v502
        %v505 = vpack.c.b16 %v504, %v504
        %506 = vrot.lane.b32.xlu0 %v505, 64
        %v507 = vpop.permute.xlu0 %506
        %509 = vst.msk [vmem:[%s387] sm:$0xf] %vm482, %v507
        %v510 = vpack.c.bf16 %v464, %v464
        %511 = vst.msk [vmem:[%s394] sm:$0xf] %vm482, %v510
        %512 = vrot.lane.b32.xlu0 %v462, 104
        %v513 = vpop.permute.xlu0 %512
        %v515 = vsel %vm475, %v513, %v470
        %516 = vrot.lane.b32.xlu0 %v397, 16
        %v517 = vpop.permute.xlu0 %516
        %v519 = vmul.f32 %v462, %v517
        %v520 = vmul.f32 %v515, %v396
        %522 = vrot.lane.b32.xlu0 %v520, 16
        %v523 = vpop.permute.xlu0 %522
        %v525 = vadd.f32 %v519, %v523
        %v526 = vmul.f32 %v525, 0.25
        %v527 = vpack.c.bf16 %v526, %v526
        %v529 = vunpack.c.l.b16 %v527
        %v530 = vpack.c.b16 %v529, %v529
        %531 = vrot.lane.b32.xlu0 %v530, 112
        %v532 = vpop.permute.xlu0 %531
        %s534 = scalar_lea.vmem %s380, 4 [#allocation9]
        %535 = vst.msk [vmem:[%s534] sm:$0xf] %vm482, %v532
        %536 = vrot.lane.b32.xlu0 %v462, 40
        %v537 = vpop.permute.xlu0 %536
        %v539 = vsel %vm475, %v537, %v485
        %540 = vrot.lane.b32.xlu0 %v397, 80
        %v541 = vpop.permute.xlu0 %540
        %v543 = vmul.f32 %v462, %v541
        %v544 = vmul.f32 %v539, %v396
        %546 = vrot.lane.b32.xlu0 %v544, 80
        %v547 = vpop.permute.xlu0 %546
        %v549 = vadd.f32 %v543, %v547
        %v550 = vpack.c.bf16 %v549, %v549
        %v552 = vunpack.c.l.b16 %v550
        %v553 = vpack.c.b16 %v552, %v552
        %554 = vrot.lane.b32.xlu0 %v553, 48
        %v555 = vpop.permute.xlu0 %554
        %s557 = scalar_lea.vmem %s387, 4 [#allocation10]
        %558 = vst.msk [vmem:[%s557] sm:$0xf] %vm482, %v555
        %v560 = vunpack.c.l.b16 %v510
        %v561 = vpack.c.b16 %v560, %v560
        %562 = vrot.lane.b32.xlu0 %v561, 112
        %v563 = vpop.permute.xlu0 %562
        %s565 = scalar_lea.vmem %s394, 4 [#allocation12]
        %566 = vst.msk [vmem:[%s565] sm:$0xf] %vm482, %v563
        %567 = vrot.lane.b32.xlu0 %v462, 88
        %v568 = vpop.permute.xlu0 %567
        %v570 = vsel %vm475, %v568, %v513
        %571 = vrot.lane.b32.xlu0 %v397, 32
        %v572 = vpop.permute.xlu0 %571
        %v574 = vmul.f32 %v462, %v572
        %v575 = vmul.f32 %v570, %v396
        %577 = vrot.lane.b32.xlu0 %v575, 32
        %v578 = vpop.permute.xlu0 %577
        %v580 = vadd.f32 %v574, %v578
        %v581 = vmul.f32 %v580, 0.25
        %v582 = vpack.c.bf16 %v581, %v581
        %v584 = vunpack.c.l.b16 %v582
        %v585 = vpack.c.b16 %v584, %v584
        %586 = vrot.lane.b32.xlu0 %v585, 96
        %v587 = vpop.permute.xlu0 %586
        %s589 = scalar_lea.vmem %s380, 8 [#allocation9]
        %590 = vst.msk [vmem:[%s589] sm:$0xf] %vm482, %v587
        %591 = vrot.lane.b32.xlu0 %v462, 24
        %v592 = vpop.permute.xlu0 %591
        %v594 = vsel %vm475, %v592, %v537
        %595 = vrot.lane.b32.xlu0 %v397, 96
        %v596 = vpop.permute.xlu0 %595
        %v598 = vmul.f32 %v462, %v596
        %v599 = vmul.f32 %v594, %v396
        %601 = vrot.lane.b32.xlu0 %v599, 96
        %v602 = vpop.permute.xlu0 %601
        %v604 = vadd.f32 %v598, %v602
        %v605 = vpack.c.bf16 %v604, %v604
        %v607 = vunpack.c.l.b16 %v605
        %v608 = vpack.c.b16 %v607, %v607
        %609 = vrot.lane.b32.xlu0 %v608, 32
        %v610 = vpop.permute.xlu0 %609
        %s612 = scalar_lea.vmem %s387, 8 [#allocation10]
        %613 = vst.msk [vmem:[%s612] sm:$0xf] %vm482, %v610
        %614 = vrot.lane.b32.xlu0 %v561, 96
        %v615 = vpop.permute.xlu0 %614
        %s617 = scalar_lea.vmem %s394, 8 [#allocation12]
        %618 = vst.msk [vmem:[%s617] sm:$0xf] %vm482, %v615
        %v619 = vsel %vm475, %v488, %v568
        %620 = vrot.lane.b32.xlu0 %v397, 48
        %v621 = vpop.permute.xlu0 %620
        %v623 = vmul.f32 %v462, %v621
        %v624 = vmul.f32 %v619, %v396
        %626 = vrot.lane.b32.xlu0 %v624, 48
        %v627 = vpop.permute.xlu0 %626
        %v629 = vadd.f32 %v623, %v627
        %v630 = vmul.f32 %v629, 0.25
        %v631 = vpack.c.bf16 %v630, %v630
        %v633 = vunpack.c.l.b16 %v631
        %v634 = vpack.c.b16 %v633, %v633
        %635 = vrot.lane.b32.xlu0 %v634, 80
        %v636 = vpop.permute.xlu0 %635
        %s638 = scalar_lea.vmem %s380, 12 [#allocation9]
        %639 = vst.msk [vmem:[%s638] sm:$0xf] %vm482, %v636
        %v640 = vsel %vm475, %v473, %v592
        %641 = vrot.lane.b32.xlu0 %v397, 112
        %v642 = vpop.permute.xlu0 %641
        %v644 = vmul.f32 %v462, %v642
        %v645 = vmul.f32 %v640, %v396
        %647 = vrot.lane.b32.xlu0 %v645, 112
        %v648 = vpop.permute.xlu0 %647
        %v650 = vadd.f32 %v644, %v648
        %v651 = vpack.c.bf16 %v650, %v650
        %v653 = vunpack.c.l.b16 %v651
        %v654 = vpack.c.b16 %v653, %v653
        %655 = vrot.lane.b32.xlu0 %v654, 16
        %v656 = vpop.permute.xlu0 %655
        %s658 = scalar_lea.vmem %s387, 12 [#allocation10]
        %659 = vst.msk [vmem:[%s658] sm:$0xf] %vm482, %v656
        %660 = vrot.lane.b32.xlu0 %v561, 80
        %v661 = vpop.permute.xlu0 %660
        %s663 = scalar_lea.vmem %s394, 12 [#allocation12]
        %664 = vst.msk [vmem:[%s663] sm:$0xf] %vm482, %v661
        %s665 = sand.u32 %s155, 1
        %s666 = scalar_lea.sflag [#allocation4], %s665
        %s667 = sand.u32 %s155, 1
        %s668 = smul.addr %s667, 16
        %s669 = scalar_lea.vmem [#allocation9], %s668
        %s670 = sand.u32 %s28, 1
        %s671 = scalar_lea.sflag [#allocation11], %s670
        %s672 = sand.u32 %s183, 1
        %s673 = smul.addr %s672, 16
        %s674 = scalar_lea.vmem [#allocation10], %s673
        %s675 = sand.u32 %s28, 1
        %s676 = scalar_lea.sflag [#allocation11], %s675
        %s677 = sand.u32 %s211, 1
        %s678 = smul.addr %s677, 16
        %s679 = scalar_lea.vmem [#allocation12], %s678
        // Predicated region
        $region53: #{tpu_custom_call.1} parent=35 // pred_check
          %p680 = pneg %p165
        $region54: #{tpu_custom_call.1} parent=35 // pred_check_branch
          %682 = sbr.rel (%p680) target = $region56
        $region55: #{tpu_custom_call.1} parent=35 // pred_region
          %s684 = ssub.s32 256, 256
          %685 = vsyncadd %s666, %s684
          %s686 = smul.addr %s32, 4
          %s687 = sadd.s32 %s33, %s686
          %s688 = smul.addr %s687, 64
          %s689 = scalar_lea.hbm %s4, %s688
          %s690 = sshll.u32 %s669, 4
          %s691 = int_to_ptr.vmem [resolvable:$true] %s690
          %696 = dma.vmem_to_hbm [thread:$0]  %s691, 256, %s689, %s666, 64, 64, 4
        $region56: #{tpu_custom_call.1} parent=35 // pred_fallthru
          _
        // Predicated region
        $region57: #{tpu_custom_call.1} parent=35 // pred_check
          %p697 = pneg %p193
        $region58: #{tpu_custom_call.1} parent=35 // pred_check_branch
          %699 = sbr.rel (%p697) target = $region60
        $region59: #{tpu_custom_call.1} parent=35 // pred_region
          %s701 = ssub.s32 256, 256
          %702 = vsyncadd %s671, %s701
          %s703 = smul.addr %s32, 4
          %s704 = sadd.s32 %s33, %s703
          %s705 = smul.addr %s704, 64
          %s706 = scalar_lea.hbm %s5, %s705
          %s707 = sshll.u32 %s674, 4
          %s708 = int_to_ptr.vmem [resolvable:$true] %s707
          %713 = dma.vmem_to_hbm [thread:$0]  %s708, 256, %s706, %s671, 64, 64, 4
        $region60: #{tpu_custom_call.1} parent=35 // pred_fallthru
          _
        // Predicated region
        $region61: #{tpu_custom_call.1} parent=35 // pred_check
          %p714 = pneg %p221
        $region62: #{tpu_custom_call.1} parent=35 // pred_check_branch
          %716 = sbr.rel (%p714) target = $region64
        $region63: #{tpu_custom_call.1} parent=35 // pred_region
          %s718 = ssub.s32 256, 256
          %719 = vsyncadd %s676, %s718
          %s720 = smul.addr %s32, 4
          %s721 = sadd.s32 %s33, %s720
          %s722 = smul.addr %s721, 64
          %s723 = scalar_lea.hbm %s6, %s722
          %s724 = sshll.u32 %s679, 4
          %s725 = int_to_ptr.vmem [resolvable:$true] %s724
          %730 = dma.vmem_to_hbm [thread:$0]  %s725, 256, %s723, %s676, 64, 64, 4
        $region64: #{tpu_custom_call.1} parent=35 // pred_fallthru
          _
      $region36: #{tpu_custom_call.1} parent=5 // pred_fallthru
        _
      %p731 = scmp.le.s32.totalorder 2, %s23
      // Predicated region
      $region65: #{tpu_custom_call.1} parent=5 // pred_check
        %p732 = pneg %p731
      $region66: #{tpu_custom_call.1} parent=5 // pred_check_branch
        %734 = sbr.rel (%p732) target = $region68
      $region67: #{tpu_custom_call.1} parent=5 // pred_region
        %s735 = ssub.s32 %s23, 2
        // Predicated region
        $region69: #{tpu_custom_call.1} parent=67 // pred_check
          %p736 = pneg %p171
        $region70: #{tpu_custom_call.1} parent=67 // pred_check_branch
          %738 = sbr.rel (%p736) target = $region72
        $region71: #{tpu_custom_call.1} parent=67 // pred_region
          %s739 = sand.u32 %s156, 1
          %s740 = scalar_lea.sflag [#allocation4], %s739
          %s741 = sand.u32 %s156, 1
          %s742 = smul.addr %s741, 16
          %s743 = scalar_lea.vmem [#allocation9], %s742
          %744 = dma.done %s740, 256
        $region72: #{tpu_custom_call.1} parent=67 // pred_fallthru
          _
        // Predicated region
        $region73: #{tpu_custom_call.1} parent=67 // pred_check
          %p745 = pneg %p199
        $region74: #{tpu_custom_call.1} parent=67 // pred_check_branch
          %747 = sbr.rel (%p745) target = $region76
        $region75: #{tpu_custom_call.1} parent=67 // pred_region
          %s748 = sand.u32 %s29, 1
          %s749 = scalar_lea.sflag [#allocation11], %s748
          %s750 = sand.u32 %s184, 1
          %s751 = smul.addr %s750, 16
          %s752 = scalar_lea.vmem [#allocation10], %s751
          %753 = dma.done %s749, 256
        $region76: #{tpu_custom_call.1} parent=67 // pred_fallthru
          _
        // Predicated region
        $region77: #{tpu_custom_call.1} parent=67 // pred_check
          %p754 = pneg %p227
        $region78: #{tpu_custom_call.1} parent=67 // pred_check_branch
          %756 = sbr.rel (%p754) target = $region80
        $region79: #{tpu_custom_call.1} parent=67 // pred_region
          %s757 = sand.u32 %s29, 1
          %s758 = scalar_lea.sflag [#allocation11], %s757
          %s759 = sand.u32 %s212, 1
          %s760 = smul.addr %s759, 16
          %s761 = scalar_lea.vmem [#allocation12], %s760
          %762 = dma.done %s758, 256
        $region80: #{tpu_custom_call.1} parent=67 // pred_fallthru
          _
      $region68: #{tpu_custom_call.1} parent=5 // pred_fallthru
        _
    $region6: #{tpu_custom_call.1} parent=1 // loop_footer
      %s27 = sadd.s32 1, %s23
    $region7: #{tpu_custom_call.1} parent=1 // loop_footer_branch
      %22 = sbr.rel target = $region3
    $region8: #{tpu_custom_call.1} parent=1 // loop_exit
      _
    %763 = vsyncpa [#allocation3], 1
    %s764 = scalar_lea.sflag [#allocation3], 1
    %765 = vsyncpa %s764, 1
    %766 = vsyncpa [#allocation6], 1
    %767 = vsyncpa [#allocation4], 1
    %s768 = scalar_lea.sflag [#allocation4], 1
    %769 = vsyncpa %s768, 1
    %770 = vsyncpa [#allocation11], 1
    %s771 = scalar_lea.sflag [#allocation11], 1
    %772 = vsyncpa %s771, 1

</llo_original>
